<compile_context>
chip_gen: v6e
topology: v6e:2x2x1
jax: 0.10.0
libtpu: 0.0.40
codegen_flags: <defaults>
</compile_context>

<pallas_src>
import jax
import jax.numpy as jnp
from jax.experimental import pallas as pl
from jax.experimental.pallas import tpu as pltpu

N_EMBED = 32
N_HEAD = 4
BLOCK_SIZE = 8           # max sequence length (causal mask size)
HEAD_SIZE = N_EMBED      # (n_embed // n_head) * n_head == n_embed in this module
FF_HIDDEN = 4 * N_EMBED
LN_EPS = 1e-5

# fused weight column layout: [ Q heads | K heads | V' heads ]   (V' = Wv_h @ Wp)
_QK_SEC = N_HEAD * HEAD_SIZE          # 128 (lane-tile aligned section width)
_QKV_WIDTH = 3 * _QK_SEC              # 384 (3 x 128, lane dense)


# --------------------------------------------------------------------------------------
# kernel
# --------------------------------------------------------------------------------------
def _normalize(h):
    """LayerNorm core with one-pass statistics; gamma/beta are folded into the weights."""
    mu = jnp.mean(h, axis=-1, keepdims=True)
    ex2 = jnp.mean(h * h, axis=-1, keepdims=True)
    var = ex2 - mu * mu
    return (h - mu) * jax.lax.rsqrt(var + LN_EPS)


def block_kernel(x_ref,
                 wqkv_ref, bqkv_ref, bp_ref,
                 w1_ref, b1_ref, w2_ref, b2_ref,
                 o_ref):
    bt, T, C = x_ref.shape
    H, D = N_HEAD, HEAD_SIZE
    mm = wqkv_ref.dtype
    rows = bt * T

    x = x_ref[...].reshape(rows, C)                                  # (rows, C) f32

    # ---------- LayerNorm 1 (gamma/beta folded) + fused QKV(+proj) matmul ----------
    xh1 = _normalize(x)
    qkv = jnp.dot(xh1.astype(mm), wqkv_ref[...],
                  preferred_element_type=jnp.float32) + bqkv_ref[...]   # (rows, 384) f32

    # lane-tile-aligned 128-wide section slices, one reshape per section
    q = qkv[:, :_QK_SEC].reshape(bt, T, H, D)
    k = qkv[:, _QK_SEC:2 * _QK_SEC].reshape(bt, T, H, D)
    v = qkv[:, 2 * _QK_SEC:].reshape(bt, T, H, D)

    # fold heads into the batch dim: (bt*H, T, D)
    qh = jnp.transpose(q, (0, 2, 1, 3)).reshape(bt * H, T, D)
    kh = jnp.transpose(k, (0, 2, 1, 3)).reshape(bt * H, T, D)
    vh = jnp.transpose(v, (0, 2, 1, 3)).reshape(bt * H, T, D)

    # ---------- scores: ONE batched matmul for all heads (C**-0.5 folded into Q) ----
    s = jnp.einsum("bqd,bkd->bqk", qh.astype(mm), kh.astype(mm),
                   preferred_element_type=jnp.float32)               # (bt*H, T, T) f32

    # causal mask as an additive bias (no selects on the big tensor)
    row_i = jax.lax.broadcasted_iota(jnp.int32, (T, T), 0)
    col_i = jax.lax.broadcasted_iota(jnp.int32, (T, T), 1)
    mask_bias = jnp.where(row_i >= col_i, 0.0, -1e30).astype(jnp.float32)
    s = s + mask_bias[None, :, :]

    # softmax vectorized over (batch, head); divide runs on the EUP slot
    m = jnp.max(s, axis=-1, keepdims=True)
    p = jnp.exp(s - m)                                               # masked entries -> 0
    denom = jnp.sum(p, axis=-1, keepdims=True)
    attn = p * pl.reciprocal(denom, approx=True)                     # (bt*H, T, T)
    # TODO(synk): attention dropout (p=0.2) not implemented -> eval-mode semantics.

    # ---------- AV: heads concatenated along the contraction (K = 4*T = 32) ---------
    a_cat = jnp.transpose(attn.reshape(bt, H, T, T),
                          (0, 2, 1, 3)).reshape(bt, T, H * T)        # (bt, T, 32)
    v_cat = vh.reshape(bt, H * T, D)                                 # (bt, 32, 32)
    mha = jnp.einsum("bqk,bkd->bqd", a_cat.astype(mm), v_cat.astype(mm),
                     preferred_element_type=jnp.float32).reshape(rows, C)

    x2 = x + mha + bp_ref[...]            # residual 1 (out-proj folded into V', bias here)

    # ---------- LayerNorm 2 (gamma/beta folded into w1/b1) + FeedForward ------------
    xh2 = _normalize(x2)
    ff = jnp.dot(xh2.astype(mm), w1_ref[...],
                 preferred_element_type=jnp.float32) + b1_ref[...]
    ff = jnp.maximum(ff, 0.0)                                        # ReLU
    ff = jnp.dot(ff.astype(mm), w2_ref[...],
                 preferred_element_type=jnp.float32) + b2_ref[...]
    # TODO(synk): FeedForward / residual dropout (p=0.2) not implemented (eval mode).

    o_ref[...] = (x2 + ff).reshape(bt, T, C)                         # residual 2


# --------------------------------------------------------------------------------------
# weight packing (wrapper side, all folds in f32 before the matmul-dtype cast)
# --------------------------------------------------------------------------------------
def _pack_params(p, mm_dtype):
    C, H, D = N_EMBED, N_HEAD, HEAD_SIZE
    scale = jnp.float32(C) ** -0.5

    # per-head Q/K weights -> (C, H*D); attention scale folded into the Q section
    wq = jnp.transpose(p["wq"], (1, 0, 2)).reshape(C, H * D) * scale
    wk = jnp.transpose(p["wk"], (1, 0, 2)).reshape(C, H * D)
    # output projection folded into per-head V:  sum_h A_h (x Wv_h) Wp == sum_h A_h (x (Wv_h Wp))
    wvp = jnp.einsum("hcd,de->hce", p["wv"], p["wp"])                 # (H, C, C)
    wvp = jnp.transpose(wvp, (1, 0, 2)).reshape(C, H * C)
    wqkv = jnp.concatenate([wq, wk, wvp], axis=1)                     # (C, 384) f32

    # fold LN1:  LN1(x) @ W == xhat @ (gamma * W) + beta @ W
    g1 = p["ln1_g"].reshape(-1)
    bqkv = p["ln1_b"].reshape(1, -1) @ wqkv                           # (1, 384) f32
    wqkv = g1[:, None] * wqkv

    # fold LN2 into the first FF layer
    g2 = p["ln2_g"].reshape(-1)
    b1 = p["ln2_b"].reshape(1, -1) @ p["w1"] + p["b1"]                # (1, 128) f32
    w1 = g2[:, None] * p["w1"]

    return (wqkv.astype(mm_dtype), bqkv, p["bp"],
            w1.astype(mm_dtype), b1,
            p["w2"].astype(mm_dtype), p["b2"])


def _tpu_generation():
    """Best-effort device query -> (two TensorCores per chip?, VMEM limit bytes)."""
    kind = ""
    try:
        kind = jax.devices()[0].device_kind.lower()
    except Exception:
        pass
    if "v7" in kind or "tpu7" in kind:
        return True, 48 * 1024 * 1024          # 2 TCs, 64 MiB VMEM per TC
    if "v5" in kind or "v6" in kind:
        return False, 96 * 1024 * 1024         # single TC, 128 MiB VMEM
    return True, 32 * 1024 * 1024              # unknown generation: stay conservative


# --------------------------------------------------------------------------------------
# wrapper
# --------------------------------------------------------------------------------------
def block_forward(x, params, *, matmul_dtype=jnp.bfloat16, batch_tile=None):
    """x: (B, T, C) float32.  params: dict of weights in (in, out) layout."""
    B, T, C = x.shape
    assert C == N_EMBED and T <= BLOCK_SIZE

    two_tc, vmem_limit = _tpu_generation()
    if batch_tile is None:
        if two_tc:
            # >=2 grid steps so both TensorCores work; tile sized for 64 MiB/TC VMEM
            batch_tile = max(1, min(256, pl.cdiv(B, 2)))
        else:
            # single TC (v5e/v6e): one big tile amortizes the ~0.35us/step overhead
            batch_tile = max(1, min(1024, B))
    grid_b = pl.cdiv(B, batch_tile)
    if two_tc and grid_b > 1 and grid_b % 2 == 1:
        grid_b += 1                            # even step count keeps both cores busy
    B_pad = grid_b * batch_tile
    if B_pad != B:
        x = jnp.pad(x, ((0, B_pad - B), (0, 0), (0, 0)))

    wqkv, bqkv, bp, w1, b1, w2, b2 = _pack_params(params, matmul_dtype)

    full2 = lambda b: (0, 0)
    in_specs = [
        pl.BlockSpec((batch_tile, T, C), lambda b: (b, 0, 0)),               # x
        pl.BlockSpec((C, _QKV_WIDTH), full2),                                # fused QKV+proj
        pl.BlockSpec((1, _QKV_WIDTH), full2),                                # its bias
        pl.BlockSpec((1, C), full2),                                         # proj bias
        pl.BlockSpec((C, FF_HIDDEN), full2), pl.BlockSpec((1, FF_HIDDEN), full2),  # ff w1, b1
        pl.BlockSpec((FF_HIDDEN, C), full2), pl.BlockSpec((1, C), full2),          # ff w2, b2
    ]
    out_spec = pl.BlockSpec((batch_tile, T, C), lambda b: (b, 0, 0))

    # advisory cost estimate (weights use constant index_maps -> fetched once)
    rows = B_pad * T
    w_item = jnp.dtype(matmul_dtype).itemsize
    flops = (2 * rows * C * _QKV_WIDTH                         # fused QKV(+proj)
             + 4 * B_pad * N_HEAD * T * T * HEAD_SIZE          # scores + AV
             + 4 * rows * C * FF_HIDDEN)                       # FF (both layers)
    transcendentals = B_pad * N_HEAD * T * (T + 1) + 2 * rows
    bytes_accessed = (2 * rows * C * 4
                      + (wqkv.size + w1.size + w2.size) * w_item
                      + (bqkv.size + bp.size + b1.size + b2.size) * 4)
    cost = pl.CostEstimate(flops=flops, transcendentals=transcendentals,
                           bytes_accessed=bytes_accessed)

    out = pl.pallas_call(
        block_kernel,
        out_shape=jax.ShapeDtypeStruct((B_pad, T, C), jnp.float32),
        grid_spec=pltpu.PrefetchScalarGridSpec(
            num_scalar_prefetch=0,
            grid=(grid_b,),
            in_specs=in_specs,
            out_specs=out_spec,
        ),
        compiler_params=pltpu.CompilerParams(
            dimension_semantics=("parallel",),
            vmem_limit_bytes=vmem_limit,
        ),
        cost_estimate=cost,
    )(x, wqkv, bqkv, bp, w1, b1, w2, b2)
    return out[:B]


# --------------------------------------------------------------------------------------
# pure-JAX reference (unfused weights, mirrors the PyTorch forward in eval mode)
# --------------------------------------------------------------------------------------
def _layernorm_ref(h, g, b):
    mu = jnp.mean(h, axis=-1, keepdims=True)
    var = jnp.mean((h - mu) ** 2, axis=-1, keepdims=True)
    return (h - mu) * jax.lax.rsqrt(var + LN_EPS) * g + b


def block_reference(x, p):
    B, T, C = x.shape
    h1 = _layernorm_ref(x, p["ln1_g"], p["ln1_b"])
    scale = C ** -0.5
    mask = jnp.tril(jnp.ones((T, T), bool))
    head_sum = jnp.zeros((B, T, HEAD_SIZE), jnp.float32)
    for h in range(N_HEAD):
        q = h1 @ p["wq"][h]
        k = h1 @ p["wk"][h]
        v = h1 @ p["wv"][h]
        wei = jnp.einsum("btd,bsd->bts", q, k) * scale
        wei = jnp.where(mask, wei, -jnp.inf)
        wei = jax.nn.softmax(wei, axis=-1)
        head_sum = head_sum + wei @ v
    x2 = x + (head_sum @ p["wp"] + p["bp"])
    h2 = _layernorm_ref(x2, p["ln2_g"], p["ln2_b"])
    ff = jnp.maximum(h2 @ p["w1"] + p["b1"], 0.0) @ p["w2"] + p["b2"]
    return x2 + ff


def init_params(key):
    ks = jax.random.split(key, 8)
    s = 0.02
    return {
        "ln1_g": jnp.ones((1, N_EMBED), jnp.float32),
        "ln1_b": jnp.zeros((1, N_EMBED), jnp.float32),
        # per-head key/query/value weights, (in, out) layout, stacked over heads
        "wq": s * jax.random.normal(ks[0], (N_HEAD, N_EMBED, HEAD_SIZE), jnp.float32),
        "wk": s * jax.random.normal(ks[1], (N_HEAD, N_EMBED, HEAD_SIZE), jnp.float32),
        "wv": s * jax.random.normal(ks[2], (N_HEAD, N_EMBED, HEAD_SIZE), jnp.float32),
        "wp": s * jax.random.normal(ks[3], (HEAD_SIZE, N_EMBED), jnp.float32),
        "bp": s * jax.random.normal(ks[4], (1, N_EMBED), jnp.float32),
        "ln2_g": jnp.ones((1, N_EMBED), jnp.float32),
        "ln2_b": jnp.zeros((1, N_EMBED), jnp.float32),
        "w1": s * jax.random.normal(ks[5], (N_EMBED, FF_HIDDEN), jnp.float32),
        "b1": jnp.zeros((1, FF_HIDDEN), jnp.float32),
        "w2": s * jax.random.normal(ks[6], (FF_HIDDEN, N_EMBED), jnp.float32),
        "b2": jnp.zeros((1, N_EMBED), jnp.float32),
    }


if __name__ == "__main__":
    key = jax.random.PRNGKey(0)
    kx, kp = jax.random.split(key)

    B, T, C = 2, BLOCK_SIZE, N_EMBED            # (2, 8, 32)
    x = jax.random.normal(kx, (B, T, C), jnp.float32)
    params = init_params(kp)

    ref = block_reference(x, params)

    # f32 matmul path: tight check of the kernel structure (folded LN/scale/projection,
    # fused-head attention, approx-reciprocal softmax normalization)
    out_f32 = jax.block_until_ready(block_forward(x, params, matmul_dtype=jnp.float32))
    assert out_f32.shape == (B, T, C)
    assert jnp.allclose(out_f32, ref, atol=5e-3, rtol=5e-3), "f32 path mismatch vs reference"

    # bf16 matmul-input path (default / fast): bf16-appropriate tolerance
    out_bf16 = jax.block_until_ready(block_forward(x, params, matmul_dtype=jnp.bfloat16))
    assert out_bf16.shape == (B, T, C)
    assert jnp.allclose(out_bf16, ref, atol=2e-2, rtol=2e-2), "bf16 path mismatch vs reference"

    print("KERNEL_OK")
</pallas_src>

<mosaic_0001>
module attributes {stable_mosaic.version = 11 : i64} {
  func.func @block_kernel(%arg0: i32, %arg1: memref<1x8x32xf32, #tpu.memory_space<vmem>>, %arg2: memref<32x384xf32, #tpu.memory_space<vmem>>, %arg3: memref<1x384xf32, #tpu.memory_space<vmem>>, %arg4: memref<1x32xf32, #tpu.memory_space<vmem>>, %arg5: memref<32x128xf32, #tpu.memory_space<vmem>>, %arg6: memref<1x128xf32, #tpu.memory_space<vmem>>, %arg7: memref<128x32xf32, #tpu.memory_space<vmem>>, %arg8: memref<1x32xf32, #tpu.memory_space<vmem>>, %arg9: memref<1x8x32xf32, #tpu.memory_space<vmem>>) attributes {dimension_semantics = [#tpu.dimension_semantics<parallel>], iteration_bounds = array<i64: 2>, scalar_prefetch = 0 : i64, scratch_operands = 0 : i64, tpu.core_type = #tpu.core_type<tc>, window_params = [{transform_indices = @transform_0, window_bounds = array<i64: 1, 8, 32>}, {pipeline_mode = #tpu.pipeline_mode<synchronous>, transform_indices = @transform_1, window_bounds = array<i64: 32, 384>}, {pipeline_mode = #tpu.pipeline_mode<synchronous>, transform_indices = @transform_2, window_bounds = array<i64: 1, 384>}, {pipeline_mode = #tpu.pipeline_mode<synchronous>, transform_indices = @transform_3, window_bounds = array<i64: 1, 32>}, {pipeline_mode = #tpu.pipeline_mode<synchronous>, transform_indices = @transform_4, window_bounds = array<i64: 32, 128>}, {pipeline_mode = #tpu.pipeline_mode<synchronous>, transform_indices = @transform_5, window_bounds = array<i64: 1, 128>}, {pipeline_mode = #tpu.pipeline_mode<synchronous>, transform_indices = @transform_6, window_bounds = array<i64: 128, 32>}, {pipeline_mode = #tpu.pipeline_mode<synchronous>, transform_indices = @transform_7, window_bounds = array<i64: 1, 32>}, {transform_indices = @transform_8, window_bounds = array<i64: 1, 8, 32>}]} {
    %c0 = arith.constant 0 : index
    %c0_0 = arith.constant 0 : index
    %c0_1 = arith.constant 0 : index
    %0 = vector.load %arg1[%c0, %c0_0, %c0_1] : memref<1x8x32xf32, #tpu.memory_space<vmem>>, vector<1x8x32xf32>
    %1 = vector.shape_cast %0 : vector<1x8x32xf32> to vector<8x32xf32>
    %cst = arith.constant dense<0.000000e+00> : vector<8xf32>
    %2 = vector.multi_reduction <add>, %1, %cst [1] : vector<8x32xf32> to vector<8xf32>
    %3 = vector.shape_cast %2 : vector<8xf32> to vector<8x1xf32>
    %cst_2 = arith.constant 3.200000e+01 : f32
    %4 = vector.broadcast %cst_2 : f32 to vector<8x1xf32>
    %5 = arith.divf %3, %4 : vector<8x1xf32>
    %6 = arith.mulf %1, %1 : vector<8x32xf32>
    %cst_3 = arith.constant dense<0.000000e+00> : vector<8xf32>
    %7 = vector.multi_reduction <add>, %6, %cst_3 [1] : vector<8x32xf32> to vector<8xf32>
    %8 = vector.shape_cast %7 : vector<8xf32> to vector<8x1xf32>
    %cst_4 = arith.constant 3.200000e+01 : f32
    %9 = vector.broadcast %cst_4 : f32 to vector<8x1xf32>
    %10 = arith.divf %8, %9 : vector<8x1xf32>
    %11 = arith.mulf %5, %5 : vector<8x1xf32>
    %12 = arith.subf %10, %11 : vector<8x1xf32>
    %13 = vector.broadcast %5 : vector<8x1xf32> to vector<8x32xf32>
    %14 = arith.subf %1, %13 : vector<8x32xf32>
    %cst_5 = arith.constant 9.99999974E-6 : f32
    %15 = vector.broadcast %cst_5 : f32 to vector<8x1xf32>
    %16 = arith.addf %12, %15 : vector<8x1xf32>
    %17 = math.rsqrt %16 : vector<8x1xf32>
    %18 = vector.broadcast %17 : vector<8x1xf32> to vector<8x32xf32>
    %19 = arith.mulf %14, %18 : vector<8x32xf32>
    %c0_6 = arith.constant 0 : index
    %c0_7 = arith.constant 0 : index
    %20 = vector.load %arg2[%c0_6, %c0_7] : memref<32x384xf32, #tpu.memory_space<vmem>>, vector<32x384xf32>
    %cst_8 = arith.constant dense<0.000000e+00> : vector<8x384xf32>
    %21 = tpu.matmul %19, %20, %cst_8 {dimension_numbers = #tpu.dot_dimension_numbers<[1], [0], [0], [1], [0, 0, 1, 1], [], []>} : vector<8x32xf32>, vector<32x384xf32>, vector<8x384xf32> -> vector<8x384xf32>
    %c0_9 = arith.constant 0 : index
    %c0_10 = arith.constant 0 : index
    %22 = vector.load %arg3[%c0_9, %c0_10] : memref<1x384xf32, #tpu.memory_space<vmem>>, vector<1x384xf32>
    %23 = vector.broadcast %22 : vector<1x384xf32> to vector<8x384xf32>
    %24 = arith.addf %21, %23 : vector<8x384xf32>
    %25 = vector.extract_strided_slice %24 {offsets = [0, 0], sizes = [8, 128], strides = [1, 1]} : vector<8x384xf32> to vector<8x128xf32>
    %26 = vector.shape_cast %25 : vector<8x128xf32> to vector<1x8x4x32xf32>
    %27 = vector.extract_strided_slice %24 {offsets = [0, 128], sizes = [8, 128], strides = [1, 1]} : vector<8x384xf32> to vector<8x128xf32>
    %28 = vector.shape_cast %27 : vector<8x128xf32> to vector<1x8x4x32xf32>
    %29 = vector.extract_strided_slice %24 {offsets = [0, 256], sizes = [8, 128], strides = [1, 1]} : vector<8x384xf32> to vector<8x128xf32>
    %30 = vector.shape_cast %29 : vector<8x128xf32> to vector<1x8x4x32xf32>
    %31 = tpu.transpose %26, [0, 2, 1, 3] : vector<1x8x4x32xf32> -> vector<1x4x8x32xf32>
    %32 = vector.shape_cast %31 : vector<1x4x8x32xf32> to vector<4x8x32xf32>
    %33 = tpu.transpose %28, [0, 2, 1, 3] : vector<1x8x4x32xf32> -> vector<1x4x8x32xf32>
    %34 = vector.shape_cast %33 : vector<1x4x8x32xf32> to vector<4x8x32xf32>
    %35 = tpu.transpose %30, [0, 2, 1, 3] : vector<1x8x4x32xf32> -> vector<1x4x8x32xf32>
    %36 = vector.shape_cast %35 : vector<1x4x8x32xf32> to vector<4x8x32xf32>
    "tpu.trace_start"() <{level = 10 : i32, message = "bqd,bkd->bqk"}> : () -> ()
    %cst_11 = arith.constant dense<0.000000e+00> : vector<4x8x8xf32>
    %37 = tpu.matmul %32, %34, %cst_11 {dimension_numbers = #tpu.dot_dimension_numbers<[2], [2], [1], [1], [0, 0, 0, 1, 1, 1], [0], [0]>} : vector<4x8x32xf32>, vector<4x8x32xf32>, vector<4x8x8xf32> -> vector<4x8x8xf32>
    "tpu.trace_stop"() : () -> ()
    %38 = tpu.iota {dimensions = array<i32: 0>} : vector<8x8xi32>
    %39 = tpu.iota {dimensions = array<i32: 1>} : vector<8x8xi32>
    %40 = arith.cmpi sge, %38, %39 : vector<8x8xi32>
    %cst_12 = arith.constant 0.000000e+00 : f32
    %cst_13 = arith.constant -1.000000e+30 : f32
    %41 = vector.broadcast %cst_12 : f32 to vector<8x8xf32>
    %42 = vector.broadcast %cst_13 : f32 to vector<8x8xf32>
    %43 = arith.select %40, %41, %42 : vector<8x8xi1>, vector<8x8xf32>
    %44 = vector.shape_cast %43 : vector<8x8xf32> to vector<1x8x8xf32>
    %45 = vector.broadcast %44 : vector<1x8x8xf32> to vector<4x8x8xf32>
    %46 = arith.addf %37, %45 : vector<4x8x8xf32>
    %cst_14 = arith.constant dense<0xFF800000> : vector<4x8xf32>
    %47 = vector.multi_reduction <maximumf>, %46, %cst_14 [2] : vector<4x8x8xf32> to vector<4x8xf32>
    %48 = vector.shape_cast %47 : vector<4x8xf32> to vector<4x8x1xf32>
    %49 = vector.broadcast %48 : vector<4x8x1xf32> to vector<4x8x8xf32>
    %50 = arith.subf %46, %49 : vector<4x8x8xf32>
    %51 = math.exp %50 : vector<4x8x8xf32>
    %cst_15 = arith.constant dense<0.000000e+00> : vector<4x8xf32>
    %52 = vector.multi_reduction <add>, %51, %cst_15 [2] : vector<4x8x8xf32> to vector<4x8xf32>
    %53 = vector.shape_cast %52 : vector<4x8xf32> to vector<4x8x1xf32>
    %54 = tpu.reciprocal %53 {approx = true} : vector<4x8x1xf32> -> vector<4x8x1xf32>
    %55 = vector.broadcast %54 : vector<4x8x1xf32> to vector<4x8x8xf32>
    %56 = arith.mulf %51, %55 : vector<4x8x8xf32>
    %57 = vector.shape_cast %56 : vector<4x8x8xf32> to vector<1x4x8x8xf32>
    %58 = tpu.transpose %57, [0, 2, 1, 3] : vector<1x4x8x8xf32> -> vector<1x8x4x8xf32>
    %59 = vector.shape_cast %58 : vector<1x8x4x8xf32> to vector<1x8x32xf32>
    %60 = vector.shape_cast %36 : vector<4x8x32xf32> to vector<1x32x32xf32>
    "tpu.trace_start"() <{level = 10 : i32, message = "bqk,bkd->bqd"}> : () -> ()
    %cst_16 = arith.constant dense<0.000000e+00> : vector<1x8x32xf32>
    %61 = tpu.matmul %59, %60, %cst_16 {dimension_numbers = #tpu.dot_dimension_numbers<[2], [1], [1], [2], [0, 0, 0, 1, 1, 2], [0], [0]>} : vector<1x8x32xf32>, vector<1x32x32xf32>, vector<1x8x32xf32> -> vector<1x8x32xf32>
    "tpu.trace_stop"() : () -> ()
    %62 = vector.shape_cast %61 : vector<1x8x32xf32> to vector<8x32xf32>
    %63 = arith.addf %1, %62 : vector<8x32xf32>
    %c0_17 = arith.constant 0 : index
    %c0_18 = arith.constant 0 : index
    %64 = vector.load %arg4[%c0_17, %c0_18] : memref<1x32xf32, #tpu.memory_space<vmem>>, vector<1x32xf32>
    %65 = vector.broadcast %64 : vector<1x32xf32> to vector<8x32xf32>
    %66 = arith.addf %63, %65 : vector<8x32xf32>
    %cst_19 = arith.constant dense<0.000000e+00> : vector<8xf32>
    %67 = vector.multi_reduction <add>, %66, %cst_19 [1] : vector<8x32xf32> to vector<8xf32>
    %68 = vector.shape_cast %67 : vector<8xf32> to vector<8x1xf32>
    %cst_20 = arith.constant 3.200000e+01 : f32
    %69 = vector.broadcast %cst_20 : f32 to vector<8x1xf32>
    %70 = arith.divf %68, %69 : vector<8x1xf32>
    %71 = arith.mulf %66, %66 : vector<8x32xf32>
    %cst_21 = arith.constant dense<0.000000e+00> : vector<8xf32>
    %72 = vector.multi_reduction <add>, %71, %cst_21 [1] : vector<8x32xf32> to vector<8xf32>
    %73 = vector.shape_cast %72 : vector<8xf32> to vector<8x1xf32>
    %cst_22 = arith.constant 3.200000e+01 : f32
    %74 = vector.broadcast %cst_22 : f32 to vector<8x1xf32>
    %75 = arith.divf %73, %74 : vector<8x1xf32>
    %76 = arith.mulf %70, %70 : vector<8x1xf32>
    %77 = arith.subf %75, %76 : vector<8x1xf32>
    %78 = vector.broadcast %70 : vector<8x1xf32> to vector<8x32xf32>
    %79 = arith.subf %66, %78 : vector<8x32xf32>
    %cst_23 = arith.constant 9.99999974E-6 : f32
    %80 = vector.broadcast %cst_23 : f32 to vector<8x1xf32>
    %81 = arith.addf %77, %80 : vector<8x1xf32>
    %82 = math.rsqrt %81 : vector<8x1xf32>
    %83 = vector.broadcast %82 : vector<8x1xf32> to vector<8x32xf32>
    %84 = arith.mulf %79, %83 : vector<8x32xf32>
    %c0_24 = arith.constant 0 : index
    %c0_25 = arith.constant 0 : index
    %85 = vector.load %arg5[%c0_24, %c0_25] : memref<32x128xf32, #tpu.memory_space<vmem>>, vector<32x128xf32>
    %cst_26 = arith.constant dense<0.000000e+00> : vector<8x128xf32>
    %86 = tpu.matmul %84, %85, %cst_26 {dimension_numbers = #tpu.dot_dimension_numbers<[1], [0], [0], [1], [0, 0, 1, 1], [], []>} : vector<8x32xf32>, vector<32x128xf32>, vector<8x128xf32> -> vector<8x128xf32>
    %c0_27 = arith.constant 0 : index
    %c0_28 = arith.constant 0 : index
    %87 = vector.load %arg6[%c0_27, %c0_28] : memref<1x128xf32, #tpu.memory_space<vmem>>, vector<1x128xf32>
    %88 = vector.broadcast %87 : vector<1x128xf32> to vector<8x128xf32>
    %89 = arith.addf %86, %88 : vector<8x128xf32>
    %cst_29 = arith.constant 0.000000e+00 : f32
    %90 = vector.broadcast %cst_29 : f32 to vector<8x128xf32>
    %91 = arith.maximumf %89, %90 : vector<8x128xf32>
    %c0_30 = arith.constant 0 : index
    %c0_31 = arith.constant 0 : index
    %92 = vector.load %arg7[%c0_30, %c0_31] : memref<128x32xf32, #tpu.memory_space<vmem>>, vector<128x32xf32>
    %cst_32 = arith.constant dense<0.000000e+00> : vector<8x32xf32>
    %93 = tpu.matmul %91, %92, %cst_32 {dimension_numbers = #tpu.dot_dimension_numbers<[1], [0], [0], [1], [0, 0, 1, 1], [], []>} : vector<8x128xf32>, vector<128x32xf32>, vector<8x32xf32> -> vector<8x32xf32>
    %c0_33 = arith.constant 0 : index
    %c0_34 = arith.constant 0 : index
    %94 = vector.load %arg8[%c0_33, %c0_34] : memref<1x32xf32, #tpu.memory_space<vmem>>, vector<1x32xf32>
    %95 = vector.broadcast %94 : vector<1x32xf32> to vector<8x32xf32>
    %96 = arith.addf %93, %95 : vector<8x32xf32>
    %97 = arith.addf %66, %96 : vector<8x32xf32>
    %98 = vector.shape_cast %97 : vector<8x32xf32> to vector<1x8x32xf32>
    %c0_35 = arith.constant 0 : index
    %c0_36 = arith.constant 0 : index
    %c0_37 = arith.constant 0 : index
    %99 = vector.load %arg9[%c0_35, %c0_36, %c0_37] : memref<1x8x32xf32, #tpu.memory_space<vmem>>, vector<1x8x32xf32>
    tpu.vector_store %arg9[%c0_35, %c0_36, %c0_37], %98 {strides = array<i32>} : memref<1x8x32xf32, #tpu.memory_space<vmem>>, vector<1x8x32xf32>,
    return
  }
  func.func @transform_0(%arg0: i32) -> (i32, i32, i32) {
    %c0_i32 = arith.constant 0 : i32
    %c0_i32_0 = arith.constant 0 : i32
    %c0_i32_1 = arith.constant 0 : i32
    return %arg0, %c0_i32, %c0_i32_0 : i32, i32, i32
  }
  func.func @transform_1(%arg0: i32) -> (i32, i32) {
    %c0_i32 = arith.constant 0 : i32
    %c0_i32_0 = arith.constant 0 : i32
    %c0_i32_1 = arith.constant 0 : i32
    return %c0_i32, %c0_i32_0 : i32, i32
  }
  func.func @transform_2(%arg0: i32) -> (i32, i32) {
    %c0_i32 = arith.constant 0 : i32
    %c0_i32_0 = arith.constant 0 : i32
    %c0_i32_1 = arith.constant 0 : i32
    return %c0_i32, %c0_i32_0 : i32, i32
  }
  func.func @transform_3(%arg0: i32) -> (i32, i32) {
    %c0_i32 = arith.constant 0 : i32
    %c0_i32_0 = arith.constant 0 : i32
    %c0_i32_1 = arith.constant 0 : i32
    return %c0_i32, %c0_i32_0 : i32, i32
  }
  func.func @transform_4(%arg0: i32) -> (i32, i32) {
    %c0_i32 = arith.constant 0 : i32
    %c0_i32_0 = arith.constant 0 : i32
    %c0_i32_1 = arith.constant 0 : i32
    return %c0_i32, %c0_i32_0 : i32, i32
  }
  func.func @transform_5(%arg0: i32) -> (i32, i32) {
    %c0_i32 = arith.constant 0 : i32
    %c0_i32_0 = arith.constant 0 : i32
    %c0_i32_1 = arith.constant 0 : i32
    return %c0_i32, %c0_i32_0 : i32, i32
  }
  func.func @transform_6(%arg0: i32) -> (i32, i32) {
    %c0_i32 = arith.constant 0 : i32
    %c0_i32_0 = arith.constant 0 : i32
    %c0_i32_1 = arith.constant 0 : i32
    return %c0_i32, %c0_i32_0 : i32, i32
  }
  func.func @transform_7(%arg0: i32) -> (i32, i32) {
    %c0_i32 = arith.constant 0 : i32
    %c0_i32_0 = arith.constant 0 : i32
    %c0_i32_1 = arith.constant 0 : i32
    return %c0_i32, %c0_i32_0 : i32, i32
  }
  func.func @transform_8(%arg0: i32) -> (i32, i32, i32) {
    %c0_i32 = arith.constant 0 : i32
    %c0_i32_0 = arith.constant 0 : i32
    %c0_i32_1 = arith.constant 0 : i32
    return %arg0, %c0_i32, %c0_i32_0 : i32, i32, i32
  }
}

</mosaic_0001>

<llo_original>
// kernel: tpu_custom_call.1
$region0: #{tpu_custom_call.1}
  #allocation0 [shape = 'u32[]', space=smem, size = 0x4, offset = 0x4, fixed_abs, tag = 'smem constant byte address 0x4 - core index']
  #allocation1 [shape = 'u32[144,128]{1,0:T(1,128)}', space=vmem, size = 0x12000, scoped, tag = 'internal scratch']
  %s0 = inlined_call_operand.vmem [shape: f32[2,8,32], index: 0, kind: input, shape index: {}]
  %s1 = inlined_call_operand.vmem [shape: f32[32,384], index: 1, kind: input, shape index: {}]
  %s2 = inlined_call_operand.vmem [shape: f32[1,384], index: 2, kind: input, shape index: {}]
  %s3 = inlined_call_operand.vmem [shape: f32[1,32], index: 3, kind: input, shape index: {}]
  %s4 = inlined_call_operand.vmem [shape: f32[32,128], index: 4, kind: input, shape index: {}]
  %s5 = inlined_call_operand.vmem [shape: f32[1,128], index: 5, kind: input, shape index: {}]
  %s6 = inlined_call_operand.vmem [shape: f32[128,32], index: 6, kind: input, shape index: {}]
  %s7 = inlined_call_operand.vmem [shape: f32[1,32], index: 7, kind: input, shape index: {}]
  %s8 = inlined_call_operand.hbm [shape: f32[2,8,32], index: 8, kind: output, shape index: {}]
  %s9 = sld [smem:[#allocation0]]
  $region65: #{tpu_custom_call.1} parent=0
    _
  %s11 = ssub.s32 1, %s9
  %s12 = scalar_select 0, %s11, %s9
  $region1: #{tpu_custom_call.1} parent=0
    #allocation2 [shape = 'u8[8192]{0}', space=vmem, size = 0x2000, scoped, tag = 'output window, operand 0']
    #allocation3 [shape = 's32[2]{0}', space=sflag, size = 0x8, scoped, tag = 'scoped memory for tpu_custom_call.1']
    %13 = vsyncpa [#allocation3], 0
    %s14 = scalar_lea.sflag [#allocation3], 1
    %15 = vsyncpa %s14, 0
    loop: start=0, step=1, limit=4
    $region2: #{tpu_custom_call.1} parent=1 // loop_pre_header
      _
    $region3: #{tpu_custom_call.1} parent=1 // loop_header
      %s17 = sphi 0, %s21
      %p18 = scmp.ge.s32.totalorder %s17, 4
      %s27 = sphi 0, %s29
      %s30 = sphi 0, %s27
      %s31 = sphi 0, %s30
      %s47 = sphi 0, %s31
      %s51 = sphi 0, %s51
      %s53 = sphi 0, %s51
      %s54 = sphi 0, %s53
      %s68 = sphi 0, %s54
      %s72 = sphi 0, %s72
      %s74 = sphi 0, %s72
      %s75 = sphi 0, %s74
      %s89 = sphi 0, %s75
      %s93 = sphi 0, %s93
      %s95 = sphi 0, %s93
      %s96 = sphi 0, %s95
      %s110 = sphi 0, %s96
      %s114 = sphi 0, %s114
      %s116 = sphi 0, %s114
      %s117 = sphi 0, %s116
      %s131 = sphi 0, %s117
      %s135 = sphi 0, %s135
      %s137 = sphi 0, %s135
      %s138 = sphi 0, %s137
      %s152 = sphi 0, %s138
      %s156 = sphi 0, %s156
      %s158 = sphi 0, %s156
      %s159 = sphi 0, %s158
      %s173 = sphi 0, %s159
      %s177 = sphi 0, %s177
      %s179 = sphi 0, %s177
      %s180 = sphi 0, %s179
      %s194 = sphi 0, %s180
      %s200 = sphi 0, %s202
      %s203 = sphi 0, %s200
      %s204 = sphi 0, %s203
      %s220 = sphi 0, %s204
    $region4: #{tpu_custom_call.1} parent=1 // loop_header_branch
      %20 = sbr.rel (%p18) target = $region8
    $region5: #{tpu_custom_call.1} parent=1 // loop_body
      %s22 = ssub.s32 %s17, 1
      %s23 = ssub.s32 %s17, 2
      %s24 = sadd.s32 %s17, 1
      %s25 = ssub.s32 %s17, %s24
      %p26 = scmp.eq.s32.totalorder %s25, 0
      %s28 = sadd.s32 %s27, 1
      %s29 = scalar_select %p26, %s27, %s28
      %p32 = pneg %p26
      %p33 = scmp.eq.s32.totalorder %s17, 1
      %p34 = por %p32, %p33
      %p35 = scmp.ne.s32.totalorder %s27, %s30
      %p36 = scmp.eq.s32.totalorder %s17, 0
      %p37 = por %p35, %p36
      %p38 = scmp.ne.s32.totalorder %s27, %s30
      %p39 = scmp.eq.s32.totalorder %s22, 1
      %p40 = por %p38, %p39
      %p41 = scmp.ne.s32.totalorder %s30, %s31
      %p42 = scmp.eq.s32.totalorder %s22, 0
      %p43 = por %p41, %p42
      %p44 = scmp.ne.s32.totalorder %s30, %s31
      %p45 = scmp.eq.s32.totalorder %s23, 1
      %p46 = por %p44, %p45
      %p48 = scmp.ne.s32.totalorder %s31, %s47
      %p49 = scmp.eq.s32.totalorder %s23, 0
      %p50 = por %p48, %p49
      %s52 = sadd.s32 %s51, 1
      %p55 = scmp.eq.s32.totalorder %s17, 1
      %p56 = scmp.ne.s32.totalorder %s51, %s53
      %p57 = scmp.eq.s32.totalorder %s17, 0
      %p58 = por %p56, %p57
      %p59 = scmp.ne.s32.totalorder %s51, %s53
      %p60 = scmp.eq.s32.totalorder %s22, 1
      %p61 = por %p59, %p60
      %p62 = scmp.ne.s32.totalorder %s53, %s54
      %p63 = scmp.eq.s32.totalorder %s22, 0
      %p64 = por %p62, %p63
      %p65 = scmp.ne.s32.totalorder %s53, %s54
      %p66 = scmp.eq.s32.totalorder %s23, 1
      %p67 = por %p65, %p66
      %p69 = scmp.ne.s32.totalorder %s54, %s68
      %p70 = scmp.eq.s32.totalorder %s23, 0
      %p71 = por %p69, %p70
      %s73 = sadd.s32 %s72, 1
      %p76 = scmp.eq.s32.totalorder %s17, 1
      %p77 = scmp.ne.s32.totalorder %s72, %s74
      %p78 = scmp.eq.s32.totalorder %s17, 0
      %p79 = por %p77, %p78
      %p80 = scmp.ne.s32.totalorder %s72, %s74
      %p81 = scmp.eq.s32.totalorder %s22, 1
      %p82 = por %p80, %p81
      %p83 = scmp.ne.s32.totalorder %s74, %s75
      %p84 = scmp.eq.s32.totalorder %s22, 0
      %p85 = por %p83, %p84
      %p86 = scmp.ne.s32.totalorder %s74, %s75
      %p87 = scmp.eq.s32.totalorder %s23, 1
      %p88 = por %p86, %p87
      %p90 = scmp.ne.s32.totalorder %s75, %s89
      %p91 = scmp.eq.s32.totalorder %s23, 0
      %p92 = por %p90, %p91
      %s94 = sadd.s32 %s93, 1
      %p97 = scmp.eq.s32.totalorder %s17, 1
      %p98 = scmp.ne.s32.totalorder %s93, %s95
      %p99 = scmp.eq.s32.totalorder %s17, 0
      %p100 = por %p98, %p99
      %p101 = scmp.ne.s32.totalorder %s93, %s95
      %p102 = scmp.eq.s32.totalorder %s22, 1
      %p103 = por %p101, %p102
      %p104 = scmp.ne.s32.totalorder %s95, %s96
      %p105 = scmp.eq.s32.totalorder %s22, 0
      %p106 = por %p104, %p105
      %p107 = scmp.ne.s32.totalorder %s95, %s96
      %p108 = scmp.eq.s32.totalorder %s23, 1
      %p109 = por %p107, %p108
      %p111 = scmp.ne.s32.totalorder %s96, %s110
      %p112 = scmp.eq.s32.totalorder %s23, 0
      %p113 = por %p111, %p112
      %s115 = sadd.s32 %s114, 1
      %p118 = scmp.eq.s32.totalorder %s17, 1
      %p119 = scmp.ne.s32.totalorder %s114, %s116
      %p120 = scmp.eq.s32.totalorder %s17, 0
      %p121 = por %p119, %p120
      %p122 = scmp.ne.s32.totalorder %s114, %s116
      %p123 = scmp.eq.s32.totalorder %s22, 1
      %p124 = por %p122, %p123
      %p125 = scmp.ne.s32.totalorder %s116, %s117
      %p126 = scmp.eq.s32.totalorder %s22, 0
      %p127 = por %p125, %p126
      %p128 = scmp.ne.s32.totalorder %s116, %s117
      %p129 = scmp.eq.s32.totalorder %s23, 1
      %p130 = por %p128, %p129
      %p132 = scmp.ne.s32.totalorder %s117, %s131
      %p133 = scmp.eq.s32.totalorder %s23, 0
      %p134 = por %p132, %p133
      %s136 = sadd.s32 %s135, 1
      %p139 = scmp.eq.s32.totalorder %s17, 1
      %p140 = scmp.ne.s32.totalorder %s135, %s137
      %p141 = scmp.eq.s32.totalorder %s17, 0
      %p142 = por %p140, %p141
      %p143 = scmp.ne.s32.totalorder %s135, %s137
      %p144 = scmp.eq.s32.totalorder %s22, 1
      %p145 = por %p143, %p144
      %p146 = scmp.ne.s32.totalorder %s137, %s138
      %p147 = scmp.eq.s32.totalorder %s22, 0
      %p148 = por %p146, %p147
      %p149 = scmp.ne.s32.totalorder %s137, %s138
      %p150 = scmp.eq.s32.totalorder %s23, 1
      %p151 = por %p149, %p150
      %p153 = scmp.ne.s32.totalorder %s138, %s152
      %p154 = scmp.eq.s32.totalorder %s23, 0
      %p155 = por %p153, %p154
      %s157 = sadd.s32 %s156, 1
      %p160 = scmp.eq.s32.totalorder %s17, 1
      %p161 = scmp.ne.s32.totalorder %s156, %s158
      %p162 = scmp.eq.s32.totalorder %s17, 0
      %p163 = por %p161, %p162
      %p164 = scmp.ne.s32.totalorder %s156, %s158
      %p165 = scmp.eq.s32.totalorder %s22, 1
      %p166 = por %p164, %p165
      %p167 = scmp.ne.s32.totalorder %s158, %s159
      %p168 = scmp.eq.s32.totalorder %s22, 0
      %p169 = por %p167, %p168
      %p170 = scmp.ne.s32.totalorder %s158, %s159
      %p171 = scmp.eq.s32.totalorder %s23, 1
      %p172 = por %p170, %p171
      %p174 = scmp.ne.s32.totalorder %s159, %s173
      %p175 = scmp.eq.s32.totalorder %s23, 0
      %p176 = por %p174, %p175
      %s178 = sadd.s32 %s177, 1
      %p181 = scmp.eq.s32.totalorder %s17, 1
      %p182 = scmp.ne.s32.totalorder %s177, %s179
      %p183 = scmp.eq.s32.totalorder %s17, 0
      %p184 = por %p182, %p183
      %p185 = scmp.ne.s32.totalorder %s177, %s179
      %p186 = scmp.eq.s32.totalorder %s22, 1
      %p187 = por %p185, %p186
      %p188 = scmp.ne.s32.totalorder %s179, %s180
      %p189 = scmp.eq.s32.totalorder %s22, 0
      %p190 = por %p188, %p189
      %p191 = scmp.ne.s32.totalorder %s179, %s180
      %p192 = scmp.eq.s32.totalorder %s23, 1
      %p193 = por %p191, %p192
      %p195 = scmp.ne.s32.totalorder %s180, %s194
      %p196 = scmp.eq.s32.totalorder %s23, 0
      %p197 = por %p195, %p196
      %s198 = ssub.s32 %s17, %s24
      %p199 = scmp.eq.s32.totalorder %s198, 0
      %s201 = sadd.s32 %s200, 1
      %s202 = scalar_select %p199, %s200, %s201
      %p205 = pneg %p199
      %p206 = scmp.eq.s32.totalorder %s17, 1
      %p207 = por %p205, %p206
      %p208 = scmp.ne.s32.totalorder %s200, %s203
      %p209 = scmp.eq.s32.totalorder %s17, 0
      %p210 = por %p208, %p209
      %p211 = scmp.ne.s32.totalorder %s200, %s203
      %p212 = scmp.eq.s32.totalorder %s22, 1
      %p213 = por %p211, %p212
      %p214 = scmp.ne.s32.totalorder %s203, %s204
      %p215 = scmp.eq.s32.totalorder %s22, 0
      %p216 = por %p214, %p215
      %p217 = scmp.ne.s32.totalorder %s203, %s204
      %p218 = scmp.eq.s32.totalorder %s23, 1
      %p219 = por %p217, %p218
      %p221 = scmp.ne.s32.totalorder %s204, %s220
      %p222 = scmp.eq.s32.totalorder %s23, 0
      %p223 = por %p221, %p222
      %p224 = scmp.le.s32.totalorder 1, %s17
      %p225 = scmp.lt.s32.totalorder %s17, 3
      %p226 = pnand %p224, %p225
      %p227 = pneg %p226
      // Predicated region
      $region9: #{tpu_custom_call.1} parent=5 // pred_check
        _
      $region10: #{tpu_custom_call.1} parent=5 // pred_check_branch
        %229 = sbr.rel (%p226) target = $region12
      $region11: #{tpu_custom_call.1} parent=5 // pred_region
        %s230 = ssub.s32 %s17, 1
        // Predicated region
        $region13: #{tpu_custom_call.1} parent=11 // pred_check
          %p231 = pneg %p64
        $region14: #{tpu_custom_call.1} parent=11 // pred_check_branch
          %233 = sbr.rel (%p231) target = $region16
        $region15: #{tpu_custom_call.1} parent=11 // pred_region
          _
        $region16: #{tpu_custom_call.1} parent=11 // pred_fallthru
          _
        // Predicated region
        $region17: #{tpu_custom_call.1} parent=11 // pred_check
          %p234 = pneg %p85
        $region18: #{tpu_custom_call.1} parent=11 // pred_check_branch
          %236 = sbr.rel (%p234) target = $region20
        $region19: #{tpu_custom_call.1} parent=11 // pred_region
          _
        $region20: #{tpu_custom_call.1} parent=11 // pred_fallthru
          _
        // Predicated region
        $region21: #{tpu_custom_call.1} parent=11 // pred_check
          %p237 = pneg %p106
        $region22: #{tpu_custom_call.1} parent=11 // pred_check_branch
          %239 = sbr.rel (%p237) target = $region24
        $region23: #{tpu_custom_call.1} parent=11 // pred_region
          _
        $region24: #{tpu_custom_call.1} parent=11 // pred_fallthru
          _
        // Predicated region
        $region25: #{tpu_custom_call.1} parent=11 // pred_check
          %p240 = pneg %p127
        $region26: #{tpu_custom_call.1} parent=11 // pred_check_branch
          %242 = sbr.rel (%p240) target = $region28
        $region27: #{tpu_custom_call.1} parent=11 // pred_region
          _
        $region28: #{tpu_custom_call.1} parent=11 // pred_fallthru
          _
        // Predicated region
        $region29: #{tpu_custom_call.1} parent=11 // pred_check
          %p243 = pneg %p148
        $region30: #{tpu_custom_call.1} parent=11 // pred_check_branch
          %245 = sbr.rel (%p243) target = $region32
        $region31: #{tpu_custom_call.1} parent=11 // pred_region
          _
        $region32: #{tpu_custom_call.1} parent=11 // pred_fallthru
          _
        // Predicated region
        $region33: #{tpu_custom_call.1} parent=11 // pred_check
          %p246 = pneg %p169
        $region34: #{tpu_custom_call.1} parent=11 // pred_check_branch
          %248 = sbr.rel (%p246) target = $region36
        $region35: #{tpu_custom_call.1} parent=11 // pred_region
          _
        $region36: #{tpu_custom_call.1} parent=11 // pred_fallthru
          _
        // Predicated region
        $region37: #{tpu_custom_call.1} parent=11 // pred_check
          %p249 = pneg %p190
        $region38: #{tpu_custom_call.1} parent=11 // pred_check_branch
          %251 = sbr.rel (%p249) target = $region40
        $region39: #{tpu_custom_call.1} parent=11 // pred_region
          _
        $region40: #{tpu_custom_call.1} parent=11 // pred_fallthru
          _
      $region12: #{tpu_custom_call.1} parent=5 // pred_fallthru
        _
      %p252 = scmp.lt.s32.totalorder %s17, 2
      // Predicated region
      $region41: #{tpu_custom_call.1} parent=5 // pred_check
        %p253 = pneg %p252
      $region42: #{tpu_custom_call.1} parent=5 // pred_check_branch
        %255 = sbr.rel (%p253) target = $region44
      $region43: #{tpu_custom_call.1} parent=5 // pred_region
        // Predicated region
        $region45: #{tpu_custom_call.1} parent=43 // pred_check
          %p256 = pneg %p37
        $region46: #{tpu_custom_call.1} parent=43 // pred_check_branch
          %258 = sbr.rel (%p256) target = $region48
        $region47: #{tpu_custom_call.1} parent=43 // pred_region
          %p259 = scmp.lt.s32.totalorder %s17, 1
          %s260 = scalar_select %p259, %s17, 1
          %s261 = smul.addr %s260, 8
          %s262 = scalar_lea.vmem %s0, %s261
        $region48: #{tpu_custom_call.1} parent=43 // pred_fallthru
          _
      $region44: #{tpu_custom_call.1} parent=5 // pred_fallthru
        _
      %p263 = scmp.le.s32.totalorder 1, %s17
      %p264 = scmp.lt.s32.totalorder %s17, 3
      %p265 = pnand %p263, %p264
      %p266 = pneg %p265
      // Predicated region
      $region49: #{tpu_custom_call.1} parent=5 // pred_check
        _
      $region50: #{tpu_custom_call.1} parent=5 // pred_check_branch
        %268 = sbr.rel (%p265) target = $region52
      $region51: #{tpu_custom_call.1} parent=5 // pred_region
        %s269 = ssub.s32 %s17, 1
        %p270 = scmp.lt.s32.totalorder %s22, 1
        %s271 = scalar_select %p270, %s22, 1
        %s272 = smul.addr %s271, 8
        %s273 = scalar_lea.vmem %s0, %s272
        %p274 = pneg %p43
        %p275 = pneg %p40
        %p276 = pneg %p64
        %p277 = pneg %p61
        %p278 = pneg %p85
        %p279 = pneg %p82
        %p280 = pneg %p106
        %p281 = pneg %p103
        %p282 = pneg %p127
        %p283 = pneg %p124
        %p284 = pneg %p148
        %p285 = pneg %p145
        %p286 = pneg %p169
        %p287 = pneg %p166
        %p288 = pneg %p190
        %p289 = pneg %p187
        %p290 = pneg %p216
        %p291 = pneg %p213
        %s292 = sand.u32 %s203, 1
        %s293 = scalar_lea.sflag [#allocation3], %s292
        %s294 = sand.u32 %s203, 1
        %s295 = smul.addr %s294, 8
        %s296 = scalar_lea.vmem [#allocation2], %s295
        %p297 = scmp.lt.s32.totalorder %s22, 1
        %s298 = scalar_select %p297, %s22, 1
        %s299 = smul.addr %s298, 8
        %s300 = scalar_lea.vmem %s0, %s299
        %v301 = vld [vmem:[%s300] sm:$0xff]
        %vm302 = vcmask 261120
        %v303 = vsel %vm302, %v301, 0.0
        %304 = vadd.xlane.f32.xlu0 %v303
        %v305 = vpop.xlane.xlu0 %304
        %v306 = vrcp.pop 32.0
        %v307 = vmul.f32 %v305, %v306
        %v308 = vmul.f32 %v301, %v301
        %v309 = vsel %vm302, %v308, 0.0
        %310 = vadd.xlane.f32.xlu0 %v309
        %v311 = vpop.xlane.xlu0 %310
        %v312 = vmul.f32 %v311, %v306
        %v313 = vmul.f32 %v307, %v307
        %v314 = vsub.f32 %v312, %v313
        %v315 = vsub.f32 %v301, %v307
        %v316 = vadd.f32 %v314, 1e-05
        %v317 = vrsqrt.pop %v316
        %v318 = vmul.f32 %v315, %v317
        %v319 = vld [vmem:[%s1] sm:$0xff]
        %v320 = vld [vmem:[%s1 + $0x8] sm:$0xff]
        %v321 = vld [vmem:[%s1 + $0x10] sm:$0xff]
        %v322 = vld [vmem:[%s1 + $0x18] sm:$0xff]
        %v323 = vld [vmem:[%s1 + $0x20] sm:$0xff]
        %v324 = vld [vmem:[%s1 + $0x28] sm:$0xff]
        %v325 = vld [vmem:[%s1 + $0x30] sm:$0xff]
        %v326 = vld [vmem:[%s1 + $0x38] sm:$0xff]
        %v327 = vld [vmem:[%s1 + $0x40] sm:$0xff]
        %v328 = vld [vmem:[%s1 + $0x48] sm:$0xff]
        %v329 = vld [vmem:[%s1 + $0x50] sm:$0xff]
        %v330 = vld [vmem:[%s1 + $0x58] sm:$0xff]
        %v331 = vld [vmem:[%s2] sm:$0x7]
        %v333 = vlaneseq
        %v334 = vshrl.u32 %v333, 7
        %v335 = vsub.s32 0, %v334
        %v336 = vrot.slane %v331, %v335
        %v337 = vlaneseq
        %v338 = vshrl.u32 %v337, 7
        %v339 = vsub.s32 1, %v338
        %v340 = vrot.slane %v331, %v339
        %v341 = vlaneseq
        %v342 = vshrl.u32 %v341, 7
        %v343 = vsub.s32 2, %v342
        %v344 = vrot.slane %v331, %v343
        %v349 = vsel %vm302, %v318, 0
        %351 = vmatprep.subr.mxu0 0.0
        %352 = vmatpush1.msra.mxu0 0.0
        %353 = vmatprep.subr.mxu0 0.0
        %354 = vmatpush1.msra.mxu0 0.0
        %355 = vmatprep.subr.mxu0 0.0
        %356 = vmatpush1.msra.mxu0 0.0
        %357 = vmatprep.subr.mxu0 0.0
        %358 = vmatpush1.msra.mxu0 0.0
        %359 = vmatprep.subr.mxu0 0.0
        %360 = vmatpush1.msra.mxu0 0.0
        %361 = vmatprep.subr.mxu0 0.0
        %362 = vmatpush1.msra.mxu0 0.0
        %363 = vmatprep.subr.mxu0 0.0
        %364 = vmatpush1.msra.mxu0 0.0
        %365 = vmatprep.subr.mxu0 0.0
        %366 = vmatpush1.msra.mxu0 0.0
        %367 = vmatprep.subr.mxu0 0.0
        %368 = vmatpush1.msra.mxu0 0.0
        %369 = vmatprep.subr.mxu0 0.0
        %370 = vmatpush1.msra.mxu0 0.0
        %371 = vmatprep.subr.mxu0 0.0
        %372 = vmatpush1.msra.mxu0 0.0
        %373 = vmatprep.subr.mxu0 0.0
        %374 = vmatpush1.msra.mxu0 0.0
        %375 = vmatprep.subr.mxu0 %v329
        %376 = vmatpush1.msra.mxu0 %v328
        %377 = vmatprep.subr.mxu0 %v326
        %378 = vmatpush1.msra.mxu0 %v325
        %379 = vmatprep.subr.mxu0 %v323
        %380 = vmatpush1.msra.mxu0 %v322
        %381 = vmatprep.subr.mxu0 %v320
        %382 = vmatpush1.msra.mxu0 %v319
        %383 = vmatprep.subr.mxu0 0.0
        %384 = vmatpush2.msra.mxu0 0.0
        %385 = vmatprep.subr.mxu0 0.0
        %386 = vmatpush2.msra.mxu0 0.0
        %387 = vmatprep.subr.mxu0 0.0
        %388 = vmatpush2.msra.mxu0 0.0
        %389 = vmatprep.subr.mxu0 0.0
        %390 = vmatpush2.msra.mxu0 0.0
        %391 = vmatprep.subr.mxu0 0.0
        %392 = vmatpush2.msra.mxu0 0.0
        %393 = vmatprep.subr.mxu0 0.0
        %394 = vmatpush2.msra.mxu0 0.0
        %395 = vmatprep.subr.mxu0 0.0
        %396 = vmatpush2.msra.mxu0 0.0
        %397 = vmatprep.subr.mxu0 0.0
        %398 = vmatpush2.msra.mxu0 0.0
        %399 = vmatprep.subr.mxu0 0.0
        %400 = vmatpush2.msra.mxu0 0.0
        %401 = vmatprep.subr.mxu0 0.0
        %402 = vmatpush2.msra.mxu0 0.0
        %403 = vmatprep.subr.mxu0 0.0
        %404 = vmatpush2.msra.mxu0 0.0
        %405 = vmatprep.subr.mxu0 0.0
        %406 = vmatpush2.msra.mxu0 0.0
        %407 = vmatprep.subr.mxu0 0.0
        %408 = vmatpush2.msra.mxu0 0.0
        %409 = vmatprep.subr.mxu0 0.0
        %410 = vmatpush2.msra.mxu0 0.0
        %411 = vmatprep.subr.mxu0 0.0
        %412 = vmatpush2.msra.mxu0 0.0
        %413 = vmatprep.subr.mxu0 0.0
        %414 = vmatpush2.msra.mxu0 0.0
        %415 = vmatprep.mubr.f32.mxu0 0.0
        %416 = vmatmul.mubr.f32.gmra.mxu0 %v349
        %v417 = vpop.f32.mrf.mxu0
        %v418 = vadd.f32 %v336, %v417
        %v419 = vpop.f32.mrf.mxu0
        %v420 = vadd.f32 %v340, %v419
        %421 = vdwg.mxu0
        %422 = vmatprep.subr.mxu0 0.0
        %423 = vmatpush1.msra.mxu0 0.0
        %424 = vmatprep.subr.mxu0 0.0
        %425 = vmatpush1.msra.mxu0 0.0
        %426 = vmatprep.subr.mxu0 0.0
        %427 = vmatpush1.msra.mxu0 0.0
        %428 = vmatprep.subr.mxu0 0.0
        %429 = vmatpush1.msra.mxu0 0.0
        %430 = vmatprep.subr.mxu0 0.0
        %431 = vmatpush1.msra.mxu0 0.0
        %432 = vmatprep.subr.mxu0 0.0
        %433 = vmatpush1.msra.mxu0 0.0
        %434 = vmatprep.subr.mxu0 0.0
        %435 = vmatpush1.msra.mxu0 0.0
        %436 = vmatprep.subr.mxu0 0.0
        %437 = vmatpush1.msra.mxu0 0.0
        %438 = vmatprep.subr.mxu0 0.0
        %439 = vmatpush1.msra.mxu0 0.0
        %440 = vmatprep.subr.mxu0 0.0
        %441 = vmatpush1.msra.mxu0 0.0
        %442 = vmatprep.subr.mxu0 0.0
        %443 = vmatpush1.msra.mxu0 0.0
        %444 = vmatprep.subr.mxu0 0.0
        %445 = vmatpush1.msra.mxu0 0.0
        %446 = vmatprep.subr.mxu0 0.0
        %447 = vmatpush1.msra.mxu0 %v330
        %448 = vmatprep.subr.mxu0 0.0
        %449 = vmatpush1.msra.mxu0 %v327
        %450 = vmatprep.subr.mxu0 0.0
        %451 = vmatpush1.msra.mxu0 %v324
        %452 = vmatprep.subr.mxu0 0.0
        %453 = vmatpush1.msra.mxu0 %v321
        %454 = vmatprep.subr.mxu0 0.0
        %455 = vmatpush2.msra.mxu0 0.0
        %456 = vmatprep.subr.mxu0 0.0
        %457 = vmatpush2.msra.mxu0 0.0
        %458 = vmatprep.subr.mxu0 0.0
        %459 = vmatpush2.msra.mxu0 0.0
        %460 = vmatprep.subr.mxu0 0.0
        %461 = vmatpush2.msra.mxu0 0.0
        %462 = vmatprep.subr.mxu0 0.0
        %463 = vmatpush2.msra.mxu0 0.0
        %464 = vmatprep.subr.mxu0 0.0
        %465 = vmatpush2.msra.mxu0 0.0
        %466 = vmatprep.subr.mxu0 0.0
        %467 = vmatpush2.msra.mxu0 0.0
        %468 = vmatprep.subr.mxu0 0.0
        %469 = vmatpush2.msra.mxu0 0.0
        %470 = vmatprep.subr.mxu0 0.0
        %471 = vmatpush2.msra.mxu0 0.0
        %472 = vmatprep.subr.mxu0 0.0
        %473 = vmatpush2.msra.mxu0 0.0
        %474 = vmatprep.subr.mxu0 0.0
        %475 = vmatpush2.msra.mxu0 0.0
        %476 = vmatprep.subr.mxu0 0.0
        %477 = vmatpush2.msra.mxu0 0.0
        %478 = vmatprep.subr.mxu0 0.0
        %479 = vmatpush2.msra.mxu0 0.0
        %480 = vmatprep.subr.mxu0 0.0
        %481 = vmatpush2.msra.mxu0 0.0
        %482 = vmatprep.subr.mxu0 0.0
        %483 = vmatpush2.msra.mxu0 0.0
        %484 = vmatprep.subr.mxu0 0.0
        %485 = vmatpush2.msra.mxu0 0.0
        %486 = vmatprep.mubr.f32.mxu0 0.0
        %487 = vmatmul.mubr.f32.gmra.mxu0 %v349
        %v488 = vpop.f32.mrf.mxu0
        %v489 = vadd.f32 %v344, %v488
        %v490 = vpop.f32.mrf.mxu0
        %491 = vdwg.mxu0
        %493 = vrot.lane.b32.xlu0 %v418, 96
        %v494 = vpop.permute.xlu0 %493
        %496 = vrot.lane.b32.xlu0 %v418, 64
        %v497 = vpop.permute.xlu0 %496
        %499 = vrot.lane.b32.xlu0 %v418, 32
        %v500 = vpop.permute.xlu0 %499
        %v502 = vcombine.low %v418, %v497
        %v503 = vcombine.high %v418, %v497
        %v505 = vunpack.c.l.s4 1983009808
        %v506 = vunpack.c.0.s8 %v505
        %v507 = vlaneseq
        %v508 = vshrl.u32 %v507, 7
        %v509 = vsub.s32 %v506, %v508
        %v510 = vrot.slane %v502, %v509
        %v512 = vunpack.c.l.s4 1983009808
        %v513 = vunpack.c.0.s8 %v512
        %v514 = vlaneseq
        %v515 = vshrl.u32 %v514, 7
        %v516 = vsub.s32 %v513, %v515
        %v517 = vrot.slane %v503, %v516
        %v518 = vcombine.low %v494, %v500
        %v519 = vcombine.high %v494, %v500
        %v521 = vunpack.c.l.s4 1983009808
        %v522 = vunpack.c.0.s8 %v521
        %v523 = vlaneseq
        %v524 = vshrl.u32 %v523, 7
        %v525 = vsub.s32 %v522, %v524
        %v526 = vrot.slane %v518, %v525
        %v528 = vunpack.c.l.s4 1983009808
        %v529 = vunpack.c.0.s8 %v528
        %v530 = vlaneseq
        %v531 = vshrl.u32 %v530, 7
        %v532 = vsub.s32 %v529, %v531
        %v533 = vrot.slane %v519, %v532
        %v534 = vcombine.low %v510, %v526
        %v535 = vcombine.high %v510, %v526
        %v537 = vunpack.c.l.s4 1934713408
        %v538 = vunpack.c.0.s8 %v537
        %v539 = vlaneseq
        %v540 = vshrl.u32 %v539, 7
        %v541 = vsub.s32 %v538, %v540
        %v542 = vrot.slane %v534, %v541
        %v544 = vunpack.c.l.s4 1934713408
        %v545 = vunpack.c.0.s8 %v544
        %v546 = vlaneseq
        %v547 = vshrl.u32 %v546, 7
        %v548 = vsub.s32 %v545, %v547
        %v549 = vrot.slane %v535, %v548
        %v550 = vcombine.low %v517, %v533
        %v551 = vcombine.high %v517, %v533
        %v553 = vunpack.c.l.s4 1934713408
        %v554 = vunpack.c.0.s8 %v553
        %v555 = vlaneseq
        %v556 = vshrl.u32 %v555, 7
        %v557 = vsub.s32 %v554, %v556
        %v558 = vrot.slane %v550, %v557
        %v560 = vunpack.c.l.s4 1934713408
        %v561 = vunpack.c.0.s8 %v560
        %v562 = vlaneseq
        %v563 = vshrl.u32 %v562, 7
        %v564 = vsub.s32 %v561, %v563
        %v565 = vrot.slane %v551, %v564
        %v566 = vcombine.high %v542, 0.0
        %v567 = vcombine.high %v549, 0.0
        %v568 = vcombine.high %v558, 0.0
        %v569 = vcombine.high %v565, 0.0
        %571 = vrot.lane.b32.xlu0 %v420, 96
        %v572 = vpop.permute.xlu0 %571
        %574 = vrot.lane.b32.xlu0 %v420, 64
        %v575 = vpop.permute.xlu0 %574
        %577 = vrot.lane.b32.xlu0 %v420, 32
        %v578 = vpop.permute.xlu0 %577
        %v580 = vcombine.low %v420, %v575
        %v581 = vcombine.high %v420, %v575
        %v583 = vunpack.c.l.s4 1983009808
        %v584 = vunpack.c.0.s8 %v583
        %v585 = vlaneseq
        %v586 = vshrl.u32 %v585, 7
        %v587 = vsub.s32 %v584, %v586
        %v588 = vrot.slane %v580, %v587
        %v590 = vunpack.c.l.s4 1983009808
        %v591 = vunpack.c.0.s8 %v590
        %v592 = vlaneseq
        %v593 = vshrl.u32 %v592, 7
        %v594 = vsub.s32 %v591, %v593
        %v595 = vrot.slane %v581, %v594
        %v596 = vcombine.low %v572, %v578
        %v597 = vcombine.high %v572, %v578
        %v599 = vunpack.c.l.s4 1983009808
        %v600 = vunpack.c.0.s8 %v599
        %v601 = vlaneseq
        %v602 = vshrl.u32 %v601, 7
        %v603 = vsub.s32 %v600, %v602
        %v604 = vrot.slane %v596, %v603
        %v606 = vunpack.c.l.s4 1983009808
        %v607 = vunpack.c.0.s8 %v606
        %v608 = vlaneseq
        %v609 = vshrl.u32 %v608, 7
        %v610 = vsub.s32 %v607, %v609
        %v611 = vrot.slane %v597, %v610
        %v612 = vcombine.low %v588, %v604
        %v613 = vcombine.high %v588, %v604
        %v615 = vunpack.c.l.s4 1934713408
        %v616 = vunpack.c.0.s8 %v615
        %v617 = vlaneseq
        %v618 = vshrl.u32 %v617, 7
        %v619 = vsub.s32 %v616, %v618
        %v620 = vrot.slane %v612, %v619
        %v622 = vunpack.c.l.s4 1934713408
        %v623 = vunpack.c.0.s8 %v622
        %v624 = vlaneseq
        %v625 = vshrl.u32 %v624, 7
        %v626 = vsub.s32 %v623, %v625
        %v627 = vrot.slane %v613, %v626
        %v628 = vcombine.low %v595, %v611
        %v629 = vcombine.high %v595, %v611
        %v631 = vunpack.c.l.s4 1934713408
        %v632 = vunpack.c.0.s8 %v631
        %v633 = vlaneseq
        %v634 = vshrl.u32 %v633, 7
        %v635 = vsub.s32 %v632, %v634
        %v636 = vrot.slane %v628, %v635
        %v638 = vunpack.c.l.s4 1934713408
        %v639 = vunpack.c.0.s8 %v638
        %v640 = vlaneseq
        %v641 = vshrl.u32 %v640, 7
        %v642 = vsub.s32 %v639, %v641
        %v643 = vrot.slane %v629, %v642
        %v644 = vcombine.high %v620, 0.0
        %v645 = vcombine.high %v627, 0.0
        %v646 = vcombine.high %v636, 0.0
        %v647 = vcombine.high %v643, 0.0
        %649 = vrot.lane.b32.xlu0 %v489, 96
        %v650 = vpop.permute.xlu0 %649
        %652 = vrot.lane.b32.xlu0 %v489, 64
        %v653 = vpop.permute.xlu0 %652
        %655 = vrot.lane.b32.xlu0 %v489, 32
        %v656 = vpop.permute.xlu0 %655
        %v658 = vcombine.low %v489, %v653
        %v659 = vcombine.high %v489, %v653
        %v661 = vunpack.c.l.s4 1983009808
        %v662 = vunpack.c.0.s8 %v661
        %v663 = vlaneseq
        %v664 = vshrl.u32 %v663, 7
        %v665 = vsub.s32 %v662, %v664
        %v666 = vrot.slane %v658, %v665
        %v668 = vunpack.c.l.s4 1983009808
        %v669 = vunpack.c.0.s8 %v668
        %v670 = vlaneseq
        %v671 = vshrl.u32 %v670, 7
        %v672 = vsub.s32 %v669, %v671
        %v673 = vrot.slane %v659, %v672
        %v674 = vcombine.low %v650, %v656
        %v675 = vcombine.high %v650, %v656
        %v677 = vunpack.c.l.s4 1983009808
        %v678 = vunpack.c.0.s8 %v677
        %v679 = vlaneseq
        %v680 = vshrl.u32 %v679, 7
        %v681 = vsub.s32 %v678, %v680
        %v682 = vrot.slane %v674, %v681
        %v684 = vunpack.c.l.s4 1983009808
        %v685 = vunpack.c.0.s8 %v684
        %v686 = vlaneseq
        %v687 = vshrl.u32 %v686, 7
        %v688 = vsub.s32 %v685, %v687
        %v689 = vrot.slane %v675, %v688
        %v690 = vcombine.low %v666, %v682
        %v691 = vcombine.high %v666, %v682
        %v693 = vunpack.c.l.s4 1934713408
        %v694 = vunpack.c.0.s8 %v693
        %v695 = vlaneseq
        %v696 = vshrl.u32 %v695, 7
        %v697 = vsub.s32 %v694, %v696
        %v698 = vrot.slane %v690, %v697
        %v700 = vunpack.c.l.s4 1934713408
        %v701 = vunpack.c.0.s8 %v700
        %v702 = vlaneseq
        %v703 = vshrl.u32 %v702, 7
        %v704 = vsub.s32 %v701, %v703
        %v705 = vrot.slane %v691, %v704
        %v706 = vcombine.low %v673, %v689
        %v707 = vcombine.high %v673, %v689
        %v709 = vunpack.c.l.s4 1934713408
        %v710 = vunpack.c.0.s8 %v709
        %v711 = vlaneseq
        %v712 = vshrl.u32 %v711, 7
        %v713 = vsub.s32 %v710, %v712
        %v714 = vrot.slane %v706, %v713
        %v716 = vunpack.c.l.s4 1934713408
        %v717 = vunpack.c.0.s8 %v716
        %v718 = vlaneseq
        %v719 = vshrl.u32 %v718, 7
        %v720 = vsub.s32 %v717, %v719
        %v721 = vrot.slane %v707, %v720
        %v722 = vcombine.high %v698, 0.0
        %v723 = vcombine.high %v705, 0.0
        %v724 = vcombine.high %v714, 0.0
        %v725 = vcombine.high %v721, 0.0
        %v726 = vcombine.low %v542, %v549
        %v728 = vunpack.c.l.s4 1983009808
        %v729 = vunpack.c.0.s8 %v728
        %v730 = vlaneseq
        %v731 = vshrl.u32 %v730, 7
        %v732 = vsub.s32 %v729, %v731
        %v733 = vrot.slane %v726, %v732
        %v734 = vcombine.low %v566, %v567
        %v736 = vunpack.c.l.s4 1983009808
        %v737 = vunpack.c.0.s8 %v736
        %v738 = vlaneseq
        %v739 = vshrl.u32 %v738, 7
        %v740 = vsub.s32 %v737, %v739
        %v741 = vrot.slane %v734, %v740
        %v742 = vcombine.low %v558, %v565
        %v744 = vunpack.c.l.s4 1983009808
        %v745 = vunpack.c.0.s8 %v744
        %v746 = vlaneseq
        %v747 = vshrl.u32 %v746, 7
        %v748 = vsub.s32 %v745, %v747
        %v749 = vrot.slane %v742, %v748
        %v750 = vcombine.low %v568, %v569
        %v752 = vunpack.c.l.s4 1983009808
        %v753 = vunpack.c.0.s8 %v752
        %v754 = vlaneseq
        %v755 = vshrl.u32 %v754, 7
        %v756 = vsub.s32 %v753, %v755
        %v757 = vrot.slane %v750, %v756
        %v758 = vcombine.low %v733, %v741
        %v759 = vcombine.high %v733, %v741
        %v761 = vunpack.c.l.s4 1934713408
        %v762 = vunpack.c.0.s8 %v761
        %v763 = vlaneseq
        %v764 = vshrl.u32 %v763, 7
        %v765 = vsub.s32 %v762, %v764
        %v766 = vrot.slane %v758, %v765
        %v768 = vunpack.c.l.s4 1934713408
        %v769 = vunpack.c.0.s8 %v768
        %v770 = vlaneseq
        %v771 = vshrl.u32 %v770, 7
        %v772 = vsub.s32 %v769, %v771
        %v773 = vrot.slane %v759, %v772
        %v774 = vcombine.low %v749, %v757
        %v775 = vcombine.high %v749, %v757
        %v777 = vunpack.c.l.s4 1934713408
        %v778 = vunpack.c.0.s8 %v777
        %v779 = vlaneseq
        %v780 = vshrl.u32 %v779, 7
        %v781 = vsub.s32 %v778, %v780
        %v782 = vrot.slane %v774, %v781
        %v784 = vunpack.c.l.s4 1934713408
        %v785 = vunpack.c.0.s8 %v784
        %v786 = vlaneseq
        %v787 = vshrl.u32 %v786, 7
        %v788 = vsub.s32 %v785, %v787
        %v789 = vrot.slane %v775, %v788
        %v790 = vcombine.low %v766, %v782
        %v791 = vcombine.high %v766, %v782
        %v792 = vcombine.low %v773, %v789
        %v793 = vcombine.high %v773, %v789
        %v794 = vcombine.low %v620, %v627
        %v796 = vunpack.c.l.s4 1983009808
        %v797 = vunpack.c.0.s8 %v796
        %v798 = vlaneseq
        %v799 = vshrl.u32 %v798, 7
        %v800 = vsub.s32 %v797, %v799
        %v801 = vrot.slane %v794, %v800
        %v802 = vcombine.low %v644, %v645
        %v804 = vunpack.c.l.s4 1983009808
        %v805 = vunpack.c.0.s8 %v804
        %v806 = vlaneseq
        %v807 = vshrl.u32 %v806, 7
        %v808 = vsub.s32 %v805, %v807
        %v809 = vrot.slane %v802, %v808
        %v810 = vcombine.low %v636, %v643
        %v812 = vunpack.c.l.s4 1983009808
        %v813 = vunpack.c.0.s8 %v812
        %v814 = vlaneseq
        %v815 = vshrl.u32 %v814, 7
        %v816 = vsub.s32 %v813, %v815
        %v817 = vrot.slane %v810, %v816
        %v818 = vcombine.low %v646, %v647
        %v820 = vunpack.c.l.s4 1983009808
        %v821 = vunpack.c.0.s8 %v820
        %v822 = vlaneseq
        %v823 = vshrl.u32 %v822, 7
        %v824 = vsub.s32 %v821, %v823
        %v825 = vrot.slane %v818, %v824
        %v826 = vcombine.low %v801, %v809
        %v827 = vcombine.high %v801, %v809
        %v829 = vunpack.c.l.s4 1934713408
        %v830 = vunpack.c.0.s8 %v829
        %v831 = vlaneseq
        %v832 = vshrl.u32 %v831, 7
        %v833 = vsub.s32 %v830, %v832
        %v834 = vrot.slane %v826, %v833
        %v836 = vunpack.c.l.s4 1934713408
        %v837 = vunpack.c.0.s8 %v836
        %v838 = vlaneseq
        %v839 = vshrl.u32 %v838, 7
        %v840 = vsub.s32 %v837, %v839
        %v841 = vrot.slane %v827, %v840
        %v842 = vcombine.low %v817, %v825
        %v843 = vcombine.high %v817, %v825
        %v845 = vunpack.c.l.s4 1934713408
        %v846 = vunpack.c.0.s8 %v845
        %v847 = vlaneseq
        %v848 = vshrl.u32 %v847, 7
        %v849 = vsub.s32 %v846, %v848
        %v850 = vrot.slane %v842, %v849
        %v852 = vunpack.c.l.s4 1934713408
        %v853 = vunpack.c.0.s8 %v852
        %v854 = vlaneseq
        %v855 = vshrl.u32 %v854, 7
        %v856 = vsub.s32 %v853, %v855
        %v857 = vrot.slane %v843, %v856
        %v858 = vcombine.low %v834, %v850
        %v859 = vcombine.high %v834, %v850
        %v860 = vcombine.low %v841, %v857
        %v861 = vcombine.high %v841, %v857
        %v862 = vcombine.low %v698, %v705
        %v864 = vunpack.c.l.s4 1983009808
        %v865 = vunpack.c.0.s8 %v864
        %v866 = vlaneseq
        %v867 = vshrl.u32 %v866, 7
        %v868 = vsub.s32 %v865, %v867
        %v869 = vrot.slane %v862, %v868
        %v870 = vcombine.low %v722, %v723
        %v872 = vunpack.c.l.s4 1983009808
        %v873 = vunpack.c.0.s8 %v872
        %v874 = vlaneseq
        %v875 = vshrl.u32 %v874, 7
        %v876 = vsub.s32 %v873, %v875
        %v877 = vrot.slane %v870, %v876
        %v878 = vcombine.low %v714, %v721
        %v880 = vunpack.c.l.s4 1983009808
        %v881 = vunpack.c.0.s8 %v880
        %v882 = vlaneseq
        %v883 = vshrl.u32 %v882, 7
        %v884 = vsub.s32 %v881, %v883
        %v885 = vrot.slane %v878, %v884
        %v886 = vcombine.low %v724, %v725
        %v888 = vunpack.c.l.s4 1983009808
        %v889 = vunpack.c.0.s8 %v888
        %v890 = vlaneseq
        %v891 = vshrl.u32 %v890, 7
        %v892 = vsub.s32 %v889, %v891
        %v893 = vrot.slane %v886, %v892
        %v894 = vcombine.low %v869, %v877
        %v895 = vcombine.high %v869, %v877
        %v897 = vunpack.c.l.s4 1934713408
        %v898 = vunpack.c.0.s8 %v897
        %v899 = vlaneseq
        %v900 = vshrl.u32 %v899, 7
        %v901 = vsub.s32 %v898, %v900
        %v902 = vrot.slane %v894, %v901
        %v904 = vunpack.c.l.s4 1934713408
        %v905 = vunpack.c.0.s8 %v904
        %v906 = vlaneseq
        %v907 = vshrl.u32 %v906, 7
        %v908 = vsub.s32 %v905, %v907
        %v909 = vrot.slane %v895, %v908
        %v910 = vcombine.low %v885, %v893
        %v911 = vcombine.high %v885, %v893
        %v913 = vunpack.c.l.s4 1934713408
        %v914 = vunpack.c.0.s8 %v913
        %v915 = vlaneseq
        %v916 = vshrl.u32 %v915, 7
        %v917 = vsub.s32 %v914, %v916
        %v918 = vrot.slane %v910, %v917
        %v920 = vunpack.c.l.s4 1934713408
        %v921 = vunpack.c.0.s8 %v920
        %v922 = vlaneseq
        %v923 = vshrl.u32 %v922, 7
        %v924 = vsub.s32 %v921, %v923
        %v925 = vrot.slane %v911, %v924
        %v926 = vcombine.low %v902, %v918
        %v927 = vcombine.high %v902, %v918
        %v928 = vcombine.low %v909, %v925
        %v929 = vcombine.high %v909, %v925
        %v930 = vlaneseq
        %v931 = vshrl.u32 %v930, 7
        %v932 = vlaneseq
        %v933 = vand.u32 %v932, 127
        %vm934 = vcmp.ge.s32.totalorder %v931, %v933
        %v935 = vsel %vm934, 0.0, -1e+30
        %v937 = vsel %vm302, %v790, 0
        %v940 = vsel %vm302, %v858, 0
        %942 = vmatprep.subr.mxu0 0.0
        %943 = vmatpush1.xpose.msra.mxu0 0.0
        %944 = vmatprep.subr.mxu0 0.0
        %945 = vmatpush1.xpose.msra.mxu0 0.0
        %946 = vmatprep.subr.mxu0 0.0
        %947 = vmatpush1.xpose.msra.mxu0 0.0
        %948 = vmatprep.subr.mxu0 0.0
        %949 = vmatpush1.xpose.msra.mxu0 0.0
        %950 = vmatprep.subr.mxu0 0.0
        %951 = vmatpush1.xpose.msra.mxu0 0.0
        %952 = vmatprep.subr.mxu0 0.0
        %953 = vmatpush1.xpose.msra.mxu0 0.0
        %954 = vmatprep.subr.mxu0 0.0
        %955 = vmatpush1.xpose.msra.mxu0 0.0
        %956 = vmatprep.subr.mxu0 0.0
        %957 = vmatpush1.xpose.msra.mxu0 0.0
        %958 = vmatprep.subr.mxu0 0.0
        %959 = vmatpush1.xpose.msra.mxu0 0.0
        %960 = vmatprep.subr.mxu0 0.0
        %961 = vmatpush1.xpose.msra.mxu0 0.0
        %962 = vmatprep.subr.mxu0 0.0
        %963 = vmatpush1.xpose.msra.mxu0 0.0
        %964 = vmatprep.subr.mxu0 0.0
        %965 = vmatpush1.xpose.msra.mxu0 0.0
        %966 = vmatprep.subr.mxu0 0.0
        %967 = vmatpush1.xpose.msra.mxu0 0.0
        %968 = vmatprep.subr.mxu0 0.0
        %969 = vmatpush1.xpose.msra.mxu0 0.0
        %970 = vmatprep.subr.mxu0 0.0
        %971 = vmatpush1.xpose.msra.mxu0 0.0
        %972 = vmatprep.subr.mxu0 0.0
        %973 = vmatpush1.xpose.msra.mxu0 %v940
        %974 = vmatprep.subr.mxu0 0.0
        %975 = vmatpush2.xpose.msra.mxu0 0.0
        %976 = vmatprep.subr.mxu0 0.0
        %977 = vmatpush2.xpose.msra.mxu0 0.0
        %978 = vmatprep.subr.mxu0 0.0
        %979 = vmatpush2.xpose.msra.mxu0 0.0
        %980 = vmatprep.subr.mxu0 0.0
        %981 = vmatpush2.xpose.msra.mxu0 0.0
        %982 = vmatprep.subr.mxu0 0.0
        %983 = vmatpush2.xpose.msra.mxu0 0.0
        %984 = vmatprep.subr.mxu0 0.0
        %985 = vmatpush2.xpose.msra.mxu0 0.0
        %986 = vmatprep.subr.mxu0 0.0
        %987 = vmatpush2.xpose.msra.mxu0 0.0
        %988 = vmatprep.subr.mxu0 0.0
        %989 = vmatpush2.xpose.msra.mxu0 0.0
        %990 = vmatprep.subr.mxu0 0.0
        %991 = vmatpush2.xpose.msra.mxu0 0.0
        %992 = vmatprep.subr.mxu0 0.0
        %993 = vmatpush2.xpose.msra.mxu0 0.0
        %994 = vmatprep.subr.mxu0 0.0
        %995 = vmatpush2.xpose.msra.mxu0 0.0
        %996 = vmatprep.subr.mxu0 0.0
        %997 = vmatpush2.xpose.msra.mxu0 0.0
        %998 = vmatprep.subr.mxu0 0.0
        %999 = vmatpush2.xpose.msra.mxu0 0.0
        %1000 = vmatprep.subr.mxu0 0.0
        %1001 = vmatpush2.xpose.msra.mxu0 0.0
        %1002 = vmatprep.subr.mxu0 0.0
        %1003 = vmatpush2.xpose.msra.mxu0 0.0
        %1004 = vmatprep.subr.mxu0 0.0
        %1005 = vmatpush2.xpose.msra.mxu0 0.0
        %1006 = vmatprep.mubr.f32.mxu0 0.0
        %1007 = vmatmul.mubr.f32.gmra.mxu0 %v937
        %v1008 = vpop.f32.mrf.mxu0
        %v1009 = vadd.f32 %v935, %v1008
        %v1010 = vpop.f32.mrf.mxu0
        %1011 = vdwg.mxu0
        %v1013 = vsel %vm302, %v791, 0
        %v1016 = vsel %vm302, %v859, 0
        %1018 = vmatprep.subr.mxu0 0.0
        %1019 = vmatpush1.xpose.msra.mxu0 0.0
        %1020 = vmatprep.subr.mxu0 0.0
        %1021 = vmatpush1.xpose.msra.mxu0 0.0
        %1022 = vmatprep.subr.mxu0 0.0
        %1023 = vmatpush1.xpose.msra.mxu0 0.0
        %1024 = vmatprep.subr.mxu0 0.0
        %1025 = vmatpush1.xpose.msra.mxu0 0.0
        %1026 = vmatprep.subr.mxu0 0.0
        %1027 = vmatpush1.xpose.msra.mxu0 0.0
        %1028 = vmatprep.subr.mxu0 0.0
        %1029 = vmatpush1.xpose.msra.mxu0 0.0
        %1030 = vmatprep.subr.mxu0 0.0
        %1031 = vmatpush1.xpose.msra.mxu0 0.0
        %1032 = vmatprep.subr.mxu0 0.0
        %1033 = vmatpush1.xpose.msra.mxu0 0.0
        %1034 = vmatprep.subr.mxu0 0.0
        %1035 = vmatpush1.xpose.msra.mxu0 0.0
        %1036 = vmatprep.subr.mxu0 0.0
        %1037 = vmatpush1.xpose.msra.mxu0 0.0
        %1038 = vmatprep.subr.mxu0 0.0
        %1039 = vmatpush1.xpose.msra.mxu0 0.0
        %1040 = vmatprep.subr.mxu0 0.0
        %1041 = vmatpush1.xpose.msra.mxu0 0.0
        %1042 = vmatprep.subr.mxu0 0.0
        %1043 = vmatpush1.xpose.msra.mxu0 0.0
        %1044 = vmatprep.subr.mxu0 0.0
        %1045 = vmatpush1.xpose.msra.mxu0 0.0
        %1046 = vmatprep.subr.mxu0 0.0
        %1047 = vmatpush1.xpose.msra.mxu0 0.0
        %1048 = vmatprep.subr.mxu0 0.0
        %1049 = vmatpush1.xpose.msra.mxu0 %v1016
        %1050 = vmatprep.subr.mxu0 0.0
        %1051 = vmatpush2.xpose.msra.mxu0 0.0
        %1052 = vmatprep.subr.mxu0 0.0
        %1053 = vmatpush2.xpose.msra.mxu0 0.0
        %1054 = vmatprep.subr.mxu0 0.0
        %1055 = vmatpush2.xpose.msra.mxu0 0.0
        %1056 = vmatprep.subr.mxu0 0.0
        %1057 = vmatpush2.xpose.msra.mxu0 0.0
        %1058 = vmatprep.subr.mxu0 0.0
        %1059 = vmatpush2.xpose.msra.mxu0 0.0
        %1060 = vmatprep.subr.mxu0 0.0
        %1061 = vmatpush2.xpose.msra.mxu0 0.0
        %1062 = vmatprep.subr.mxu0 0.0
        %1063 = vmatpush2.xpose.msra.mxu0 0.0
        %1064 = vmatprep.subr.mxu0 0.0
        %1065 = vmatpush2.xpose.msra.mxu0 0.0
        %1066 = vmatprep.subr.mxu0 0.0
        %1067 = vmatpush2.xpose.msra.mxu0 0.0
        %1068 = vmatprep.subr.mxu0 0.0
        %1069 = vmatpush2.xpose.msra.mxu0 0.0
        %1070 = vmatprep.subr.mxu0 0.0
        %1071 = vmatpush2.xpose.msra.mxu0 0.0
        %1072 = vmatprep.subr.mxu0 0.0
        %1073 = vmatpush2.xpose.msra.mxu0 0.0
        %1074 = vmatprep.subr.mxu0 0.0
        %1075 = vmatpush2.xpose.msra.mxu0 0.0
        %1076 = vmatprep.subr.mxu0 0.0
        %1077 = vmatpush2.xpose.msra.mxu0 0.0
        %1078 = vmatprep.subr.mxu0 0.0
        %1079 = vmatpush2.xpose.msra.mxu0 0.0
        %1080 = vmatprep.subr.mxu0 0.0
        %1081 = vmatpush2.xpose.msra.mxu0 0.0
        %1082 = vmatprep.mubr.f32.mxu0 0.0
        %1083 = vmatmul.mubr.f32.gmra.mxu0 %v1013
        %v1084 = vpop.f32.mrf.mxu0
        %v1085 = vadd.f32 %v935, %v1084
        %v1086 = vpop.f32.mrf.mxu0
        %1087 = vdwg.mxu0
        %v1089 = vsel %vm302, %v792, 0
        %v1092 = vsel %vm302, %v860, 0
        %1094 = vmatprep.subr.mxu0 0.0
        %1095 = vmatpush1.xpose.msra.mxu0 0.0
        %1096 = vmatprep.subr.mxu0 0.0
        %1097 = vmatpush1.xpose.msra.mxu0 0.0
        %1098 = vmatprep.subr.mxu0 0.0
        %1099 = vmatpush1.xpose.msra.mxu0 0.0
        %1100 = vmatprep.subr.mxu0 0.0
        %1101 = vmatpush1.xpose.msra.mxu0 0.0
        %1102 = vmatprep.subr.mxu0 0.0
        %1103 = vmatpush1.xpose.msra.mxu0 0.0
        %1104 = vmatprep.subr.mxu0 0.0
        %1105 = vmatpush1.xpose.msra.mxu0 0.0
        %1106 = vmatprep.subr.mxu0 0.0
        %1107 = vmatpush1.xpose.msra.mxu0 0.0
        %1108 = vmatprep.subr.mxu0 0.0
        %1109 = vmatpush1.xpose.msra.mxu0 0.0
        %1110 = vmatprep.subr.mxu0 0.0
        %1111 = vmatpush1.xpose.msra.mxu0 0.0
        %1112 = vmatprep.subr.mxu0 0.0
        %1113 = vmatpush1.xpose.msra.mxu0 0.0
        %1114 = vmatprep.subr.mxu0 0.0
        %1115 = vmatpush1.xpose.msra.mxu0 0.0
        %1116 = vmatprep.subr.mxu0 0.0
        %1117 = vmatpush1.xpose.msra.mxu0 0.0
        %1118 = vmatprep.subr.mxu0 0.0
        %1119 = vmatpush1.xpose.msra.mxu0 0.0
        %1120 = vmatprep.subr.mxu0 0.0
        %1121 = vmatpush1.xpose.msra.mxu0 0.0
        %1122 = vmatprep.subr.mxu0 0.0
        %1123 = vmatpush1.xpose.msra.mxu0 0.0
        %1124 = vmatprep.subr.mxu0 0.0
        %1125 = vmatpush1.xpose.msra.mxu0 %v1092
        %1126 = vmatprep.subr.mxu0 0.0
        %1127 = vmatpush2.xpose.msra.mxu0 0.0
        %1128 = vmatprep.subr.mxu0 0.0
        %1129 = vmatpush2.xpose.msra.mxu0 0.0
        %1130 = vmatprep.subr.mxu0 0.0
        %1131 = vmatpush2.xpose.msra.mxu0 0.0
        %1132 = vmatprep.subr.mxu0 0.0
        %1133 = vmatpush2.xpose.msra.mxu0 0.0
        %1134 = vmatprep.subr.mxu0 0.0
        %1135 = vmatpush2.xpose.msra.mxu0 0.0
        %1136 = vmatprep.subr.mxu0 0.0
        %1137 = vmatpush2.xpose.msra.mxu0 0.0
        %1138 = vmatprep.subr.mxu0 0.0
        %1139 = vmatpush2.xpose.msra.mxu0 0.0
        %1140 = vmatprep.subr.mxu0 0.0
        %1141 = vmatpush2.xpose.msra.mxu0 0.0
        %1142 = vmatprep.subr.mxu0 0.0
        %1143 = vmatpush2.xpose.msra.mxu0 0.0
        %1144 = vmatprep.subr.mxu0 0.0
        %1145 = vmatpush2.xpose.msra.mxu0 0.0
        %1146 = vmatprep.subr.mxu0 0.0
        %1147 = vmatpush2.xpose.msra.mxu0 0.0
        %1148 = vmatprep.subr.mxu0 0.0
        %1149 = vmatpush2.xpose.msra.mxu0 0.0
        %1150 = vmatprep.subr.mxu0 0.0
        %1151 = vmatpush2.xpose.msra.mxu0 0.0
        %1152 = vmatprep.subr.mxu0 0.0
        %1153 = vmatpush2.xpose.msra.mxu0 0.0
        %1154 = vmatprep.subr.mxu0 0.0
        %1155 = vmatpush2.xpose.msra.mxu0 0.0
        %1156 = vmatprep.subr.mxu0 0.0
        %1157 = vmatpush2.xpose.msra.mxu0 0.0
        %1158 = vmatprep.mubr.f32.mxu0 0.0
        %1159 = vmatmul.mubr.f32.gmra.mxu0 %v1089
        %v1160 = vpop.f32.mrf.mxu0
        %v1161 = vadd.f32 %v935, %v1160
        %v1162 = vpop.f32.mrf.mxu0
        %1163 = vdwg.mxu0
        %v1165 = vsel %vm302, %v793, 0
        %v1168 = vsel %vm302, %v861, 0
        %1170 = vmatprep.subr.mxu0 0.0
        %1171 = vmatpush1.xpose.msra.mxu0 0.0
        %1172 = vmatprep.subr.mxu0 0.0
        %1173 = vmatpush1.xpose.msra.mxu0 0.0
        %1174 = vmatprep.subr.mxu0 0.0
        %1175 = vmatpush1.xpose.msra.mxu0 0.0
        %1176 = vmatprep.subr.mxu0 0.0
        %1177 = vmatpush1.xpose.msra.mxu0 0.0
        %1178 = vmatprep.subr.mxu0 0.0
        %1179 = vmatpush1.xpose.msra.mxu0 0.0
        %1180 = vmatprep.subr.mxu0 0.0
        %1181 = vmatpush1.xpose.msra.mxu0 0.0
        %1182 = vmatprep.subr.mxu0 0.0
        %1183 = vmatpush1.xpose.msra.mxu0 0.0
        %1184 = vmatprep.subr.mxu0 0.0
        %1185 = vmatpush1.xpose.msra.mxu0 0.0
        %1186 = vmatprep.subr.mxu0 0.0
        %1187 = vmatpush1.xpose.msra.mxu0 0.0
        %1188 = vmatprep.subr.mxu0 0.0
        %1189 = vmatpush1.xpose.msra.mxu0 0.0
        %1190 = vmatprep.subr.mxu0 0.0
        %1191 = vmatpush1.xpose.msra.mxu0 0.0
        %1192 = vmatprep.subr.mxu0 0.0
        %1193 = vmatpush1.xpose.msra.mxu0 0.0
        %1194 = vmatprep.subr.mxu0 0.0
        %1195 = vmatpush1.xpose.msra.mxu0 0.0
        %1196 = vmatprep.subr.mxu0 0.0
        %1197 = vmatpush1.xpose.msra.mxu0 0.0
        %1198 = vmatprep.subr.mxu0 0.0
        %1199 = vmatpush1.xpose.msra.mxu0 0.0
        %1200 = vmatprep.subr.mxu0 0.0
        %1201 = vmatpush1.xpose.msra.mxu0 %v1168
        %1202 = vmatprep.subr.mxu0 0.0
        %1203 = vmatpush2.xpose.msra.mxu0 0.0
        %1204 = vmatprep.subr.mxu0 0.0
        %1205 = vmatpush2.xpose.msra.mxu0 0.0
        %1206 = vmatprep.subr.mxu0 0.0
        %1207 = vmatpush2.xpose.msra.mxu0 0.0
        %1208 = vmatprep.subr.mxu0 0.0
        %1209 = vmatpush2.xpose.msra.mxu0 0.0
        %1210 = vmatprep.subr.mxu0 0.0
        %1211 = vmatpush2.xpose.msra.mxu0 0.0
        %1212 = vmatprep.subr.mxu0 0.0
        %1213 = vmatpush2.xpose.msra.mxu0 0.0
        %1214 = vmatprep.subr.mxu0 0.0
        %1215 = vmatpush2.xpose.msra.mxu0 0.0
        %1216 = vmatprep.subr.mxu0 0.0
        %1217 = vmatpush2.xpose.msra.mxu0 0.0
        %1218 = vmatprep.subr.mxu0 0.0
        %1219 = vmatpush2.xpose.msra.mxu0 0.0
        %1220 = vmatprep.subr.mxu0 0.0
        %1221 = vmatpush2.xpose.msra.mxu0 0.0
        %1222 = vmatprep.subr.mxu0 0.0
        %1223 = vmatpush2.xpose.msra.mxu0 0.0
        %1224 = vmatprep.subr.mxu0 0.0
        %1225 = vmatpush2.xpose.msra.mxu0 0.0
        %1226 = vmatprep.subr.mxu0 0.0
        %1227 = vmatpush2.xpose.msra.mxu0 0.0
        %1228 = vmatprep.subr.mxu0 0.0
        %1229 = vmatpush2.xpose.msra.mxu0 0.0
        %1230 = vmatprep.subr.mxu0 0.0
        %1231 = vmatpush2.xpose.msra.mxu0 0.0
        %1232 = vmatprep.subr.mxu0 0.0
        %1233 = vmatpush2.xpose.msra.mxu0 0.0
        %1234 = vmatprep.mubr.f32.mxu0 0.0
        %1235 = vmatmul.mubr.f32.gmra.mxu0 %v1165
        %v1236 = vpop.f32.mrf.mxu0
        %v1237 = vadd.f32 %v935, %v1236
        %v1238 = vpop.f32.mrf.mxu0
        %1239 = vdwg.mxu0
        %vm1240 = vcmask 64512
        %v1241 = vsel %vm1240, %v1009, -inf
        %1242 = vmax.xlane.f32.xlu0 %v1241
        %v1243 = vpop.xlane.xlu0 %1242
        %v1244 = vsel %vm1240, %v1085, -inf
        %1245 = vmax.xlane.f32.xlu0 %v1244
        %v1246 = vpop.xlane.xlu0 %1245
        %v1247 = vsel %vm1240, %v1161, -inf
        %1248 = vmax.xlane.f32.xlu0 %v1247
        %v1249 = vpop.xlane.xlu0 %1248
        %v1250 = vsel %vm1240, %v1237, -inf
        %1251 = vmax.xlane.f32.xlu0 %v1250
        %v1252 = vpop.xlane.xlu0 %1251
        %v1253 = vsub.f32 %v1009, %v1243
        %v1254 = vsub.f32 %v1085, %v1246
        %v1255 = vsub.f32 %v1161, %v1249
        %v1256 = vsub.f32 %v1237, %v1252
        %v1257 = vmul.f32 %v1253, 1.442695
        %v1258 = vpow.pop %v1257
        %v1259 = vmul.f32 %v1254, 1.442695
        %v1260 = vpow.pop %v1259
        %v1261 = vmul.f32 %v1255, 1.442695
        %v1262 = vpow.pop %v1261
        %v1263 = vmul.f32 %v1256, 1.442695
        %v1264 = vpow.pop %v1263
        %v1265 = vsel %vm1240, %v1258, 0.0
        %1266 = vadd.xlane.f32.xlu0 %v1265
        %v1267 = vpop.xlane.xlu0 %1266
        %v1268 = vsel %vm1240, %v1260, 0.0
        %1269 = vadd.xlane.f32.xlu0 %v1268
        %v1270 = vpop.xlane.xlu0 %1269
        %v1271 = vsel %vm1240, %v1262, 0.0
        %1272 = vadd.xlane.f32.xlu0 %v1271
        %v1273 = vpop.xlane.xlu0 %1272
        %v1274 = vsel %vm1240, %v1264, 0.0
        %1275 = vadd.xlane.f32.xlu0 %v1274
        %v1276 = vpop.xlane.xlu0 %1275
        %v1277 = vrcp.pop %v1267
        %v1278 = vrcp.pop %v1270
        %v1279 = vrcp.pop %v1273
        %v1280 = vrcp.pop %v1276
        %v1281 = vmul.f32 %v1258, %v1277
        %v1282 = vmul.f32 %v1260, %v1278
        %v1283 = vmul.f32 %v1262, %v1279
        %v1284 = vmul.f32 %v1264, %v1280
        %v1285 = vcombine.low %v1281, %v1283
        %v1286 = vcombine.high %v1281, %v1283
        %v1288 = vunpack.c.l.s4 1983009808
        %v1289 = vunpack.c.0.s8 %v1288
        %v1290 = vlaneseq
        %v1291 = vshrl.u32 %v1290, 7
        %v1292 = vsub.s32 %v1289, %v1291
        %v1293 = vrot.slane %v1285, %v1292
        %v1295 = vunpack.c.l.s4 1983009808
        %v1296 = vunpack.c.0.s8 %v1295
        %v1297 = vlaneseq
        %v1298 = vshrl.u32 %v1297, 7
        %v1299 = vsub.s32 %v1296, %v1298
        %v1300 = vrot.slane %v1286, %v1299
        %v1301 = vcombine.low %v1282, %v1284
        %v1302 = vcombine.high %v1282, %v1284
        %v1304 = vunpack.c.l.s4 1983009808
        %v1305 = vunpack.c.0.s8 %v1304
        %v1306 = vlaneseq
        %v1307 = vshrl.u32 %v1306, 7
        %v1308 = vsub.s32 %v1305, %v1307
        %v1309 = vrot.slane %v1301, %v1308
        %v1311 = vunpack.c.l.s4 1983009808
        %v1312 = vunpack.c.0.s8 %v1311
        %v1313 = vlaneseq
        %v1314 = vshrl.u32 %v1313, 7
        %v1315 = vsub.s32 %v1312, %v1314
        %v1316 = vrot.slane %v1302, %v1315
        %v1317 = vcombine.low %v1293, %v1309
        %v1318 = vcombine.high %v1293, %v1309
        %v1320 = vunpack.c.l.s4 1934713408
        %v1321 = vunpack.c.0.s8 %v1320
        %v1322 = vlaneseq
        %v1323 = vshrl.u32 %v1322, 7
        %v1324 = vsub.s32 %v1321, %v1323
        %v1325 = vrot.slane %v1317, %v1324
        %v1327 = vunpack.c.l.s4 1934713408
        %v1328 = vunpack.c.0.s8 %v1327
        %v1329 = vlaneseq
        %v1330 = vshrl.u32 %v1329, 7
        %v1331 = vsub.s32 %v1328, %v1330
        %v1332 = vrot.slane %v1318, %v1331
        %v1333 = vcombine.low %v1300, %v1316
        %v1334 = vcombine.high %v1300, %v1316
        %v1336 = vunpack.c.l.s4 1934713408
        %v1337 = vunpack.c.0.s8 %v1336
        %v1338 = vlaneseq
        %v1339 = vshrl.u32 %v1338, 7
        %v1340 = vsub.s32 %v1337, %v1339
        %v1341 = vrot.slane %v1333, %v1340
        %v1343 = vunpack.c.l.s4 1934713408
        %v1344 = vunpack.c.0.s8 %v1343
        %v1345 = vlaneseq
        %v1346 = vshrl.u32 %v1345, 7
        %v1347 = vsub.s32 %v1344, %v1346
        %v1348 = vrot.slane %v1334, %v1347
        %v1349 = vcombine.high %v1325, 0.0
        %v1350 = vcombine.high %v1332, 0.0
        %v1351 = vcombine.high %v1341, 0.0
        %v1352 = vcombine.high %v1348, 0.0
        %v1353 = vcombine.low %v1325, %v1332
        %v1355 = vunpack.c.l.s4 1983009808
        %v1356 = vunpack.c.0.s8 %v1355
        %v1357 = vlaneseq
        %v1358 = vshrl.u32 %v1357, 7
        %v1359 = vsub.s32 %v1356, %v1358
        %v1360 = vrot.slane %v1353, %v1359
        %v1361 = vcombine.low %v1349, %v1350
        %v1363 = vunpack.c.l.s4 1983009808
        %v1364 = vunpack.c.0.s8 %v1363
        %v1365 = vlaneseq
        %v1366 = vshrl.u32 %v1365, 7
        %v1367 = vsub.s32 %v1364, %v1366
        %v1368 = vrot.slane %v1361, %v1367
        %v1369 = vcombine.low %v1341, %v1348
        %v1371 = vunpack.c.l.s4 1983009808
        %v1372 = vunpack.c.0.s8 %v1371
        %v1373 = vlaneseq
        %v1374 = vshrl.u32 %v1373, 7
        %v1375 = vsub.s32 %v1372, %v1374
        %v1376 = vrot.slane %v1369, %v1375
        %v1377 = vcombine.low %v1351, %v1352
        %v1379 = vunpack.c.l.s4 1983009808
        %v1380 = vunpack.c.0.s8 %v1379
        %v1381 = vlaneseq
        %v1382 = vshrl.u32 %v1381, 7
        %v1383 = vsub.s32 %v1380, %v1382
        %v1384 = vrot.slane %v1377, %v1383
        %v1385 = vcombine.low %v1360, %v1368
        %v1386 = vcombine.high %v1360, %v1368
        %v1388 = vunpack.c.l.s4 1934713408
        %v1389 = vunpack.c.0.s8 %v1388
        %v1390 = vlaneseq
        %v1391 = vshrl.u32 %v1390, 7
        %v1392 = vsub.s32 %v1389, %v1391
        %v1393 = vrot.slane %v1385, %v1392
        %v1395 = vunpack.c.l.s4 1934713408
        %v1396 = vunpack.c.0.s8 %v1395
        %v1397 = vlaneseq
        %v1398 = vshrl.u32 %v1397, 7
        %v1399 = vsub.s32 %v1396, %v1398
        %v1400 = vrot.slane %v1386, %v1399
        %v1401 = vcombine.low %v1376, %v1384
        %v1402 = vcombine.high %v1376, %v1384
        %v1404 = vunpack.c.l.s4 1934713408
        %v1405 = vunpack.c.0.s8 %v1404
        %v1406 = vlaneseq
        %v1407 = vshrl.u32 %v1406, 7
        %v1408 = vsub.s32 %v1405, %v1407
        %v1409 = vrot.slane %v1401, %v1408
        %v1411 = vunpack.c.l.s4 1934713408
        %v1412 = vunpack.c.0.s8 %v1411
        %v1413 = vlaneseq
        %v1414 = vshrl.u32 %v1413, 7
        %v1415 = vsub.s32 %v1412, %v1414
        %v1416 = vrot.slane %v1402, %v1415
        %v1417 = vcombine.low %v1393, %v1409
        %v1418 = vcombine.high %v1393, %v1409
        %v1419 = vcombine.low %v1400, %v1416
        %v1420 = vcombine.high %v1400, %v1416
        %1422 = vrot.lane.b32.xlu0 %v1418, 8
        %v1423 = vpop.permute.xlu0 %1422
        %1426 = vrot.lane.b32.xlu0 %v1419, 16
        %v1427 = vpop.permute.xlu0 %1426
        %1430 = vrot.lane.b32.xlu0 %v1420, 24
        %v1431 = vpop.permute.xlu0 %1430
        %v1433 = vsel %vm1240, %v1417, %v1423
        %vm1434 = vcmask 130048
        %v1435 = vsel %vm1434, %v1433, %v1427
        %vm1436 = vcmask 195584
        %v1437 = vsel %vm1436, %v1435, %v1431
        %v1439 = vsel %vm302, %v1437, 0
        %1441 = vmatprep.subr.mxu0 0.0
        %1442 = vmatpush1.msra.mxu0 0.0
        %1443 = vmatprep.subr.mxu0 0.0
        %1444 = vmatpush1.msra.mxu0 0.0
        %1445 = vmatprep.subr.mxu0 0.0
        %1446 = vmatpush1.msra.mxu0 0.0
        %1447 = vmatprep.subr.mxu0 0.0
        %1448 = vmatpush1.msra.mxu0 0.0
        %1449 = vmatprep.subr.mxu0 0.0
        %1450 = vmatpush1.msra.mxu0 0.0
        %1451 = vmatprep.subr.mxu0 0.0
        %1452 = vmatpush1.msra.mxu0 0.0
        %1453 = vmatprep.subr.mxu0 0.0
        %1454 = vmatpush1.msra.mxu0 0.0
        %1455 = vmatprep.subr.mxu0 0.0
        %1456 = vmatpush1.msra.mxu0 0.0
        %1457 = vmatprep.subr.mxu0 0.0
        %1458 = vmatpush1.msra.mxu0 0.0
        %1459 = vmatprep.subr.mxu0 0.0
        %1460 = vmatpush1.msra.mxu0 0.0
        %1461 = vmatprep.subr.mxu0 0.0
        %1462 = vmatpush1.msra.mxu0 0.0
        %1463 = vmatprep.subr.mxu0 0.0
        %1464 = vmatpush1.msra.mxu0 0.0
        %1465 = vmatprep.subr.mxu0 0.0
        %1466 = vmatpush1.msra.mxu0 %v929
        %1467 = vmatprep.subr.mxu0 0.0
        %1468 = vmatpush1.msra.mxu0 %v928
        %1469 = vmatprep.subr.mxu0 0.0
        %1470 = vmatpush1.msra.mxu0 %v927
        %1471 = vmatprep.subr.mxu0 0.0
        %1472 = vmatpush1.msra.mxu0 %v926
        %1473 = vmatprep.subr.mxu0 0.0
        %1474 = vmatpush2.msra.mxu0 0.0
        %1475 = vmatprep.subr.mxu0 0.0
        %1476 = vmatpush2.msra.mxu0 0.0
        %1477 = vmatprep.subr.mxu0 0.0
        %1478 = vmatpush2.msra.mxu0 0.0
        %1479 = vmatprep.subr.mxu0 0.0
        %1480 = vmatpush2.msra.mxu0 0.0
        %1481 = vmatprep.subr.mxu0 0.0
        %1482 = vmatpush2.msra.mxu0 0.0
        %1483 = vmatprep.subr.mxu0 0.0
        %1484 = vmatpush2.msra.mxu0 0.0
        %1485 = vmatprep.subr.mxu0 0.0
        %1486 = vmatpush2.msra.mxu0 0.0
        %1487 = vmatprep.subr.mxu0 0.0
        %1488 = vmatpush2.msra.mxu0 0.0
        %1489 = vmatprep.subr.mxu0 0.0
        %1490 = vmatpush2.msra.mxu0 0.0
        %1491 = vmatprep.subr.mxu0 0.0
        %1492 = vmatpush2.msra.mxu0 0.0
        %1493 = vmatprep.subr.mxu0 0.0
        %1494 = vmatpush2.msra.mxu0 0.0
        %1495 = vmatprep.subr.mxu0 0.0
        %1496 = vmatpush2.msra.mxu0 0.0
        %1497 = vmatprep.subr.mxu0 0.0
        %1498 = vmatpush2.msra.mxu0 0.0
        %1499 = vmatprep.subr.mxu0 0.0
        %1500 = vmatpush2.msra.mxu0 0.0
        %1501 = vmatprep.subr.mxu0 0.0
        %1502 = vmatpush2.msra.mxu0 0.0
        %1503 = vmatprep.subr.mxu0 0.0
        %1504 = vmatpush2.msra.mxu0 0.0
        %1505 = vmatprep.mubr.f32.mxu0 0.0
        %1506 = vmatmul.mubr.f32.gmra.mxu0 %v1439
        %v1507 = vpop.f32.mrf.mxu0
        %v1508 = vadd.f32 0.0, %v1507
        %v1509 = vpop.f32.mrf.mxu0
        %1510 = vdwg.mxu0
        %v1511 = vadd.f32 %v301, %v1508
        %v1512 = vld [vmem:[%s3] sm:$0x1]
        %v1514 = vlaneseq
        %v1515 = vshrl.u32 %v1514, 7
        %v1516 = vsub.s32 0, %v1515
        %v1517 = vrot.slane %v1512, %v1516
        %v1519 = vadd.f32 %v1511, %v1517
        %v1520 = vsel %vm302, %v1519, 0.0
        %1521 = vadd.xlane.f32.xlu0 %v1520
        %v1522 = vpop.xlane.xlu0 %1521
        %v1523 = vmul.f32 %v1522, %v306
        %v1524 = vmul.f32 %v1519, %v1519
        %v1525 = vsel %vm302, %v1524, 0.0
        %1526 = vadd.xlane.f32.xlu0 %v1525
        %v1527 = vpop.xlane.xlu0 %1526
        %v1528 = vmul.f32 %v1527, %v306
        %v1529 = vmul.f32 %v1523, %v1523
        %v1530 = vsub.f32 %v1528, %v1529
        %v1531 = vsub.f32 %v1519, %v1523
        %v1532 = vadd.f32 %v1530, 1e-05
        %v1533 = vrsqrt.pop %v1532
        %v1534 = vmul.f32 %v1531, %v1533
        %v1535 = vld [vmem:[%s4] sm:$0xff]
        %v1536 = vld [vmem:[%s4 + $0x8] sm:$0xff]
        %v1537 = vld [vmem:[%s4 + $0x10] sm:$0xff]
        %v1538 = vld [vmem:[%s4 + $0x18] sm:$0xff]
        %v1539 = vld [vmem:[%s5] sm:$0x1]
        %v1541 = vlaneseq
        %v1542 = vshrl.u32 %v1541, 7
        %v1543 = vsub.s32 0, %v1542
        %v1544 = vrot.slane %v1539, %v1543
        %v1547 = vsel %vm302, %v1534, 0
        %1549 = vmatprep.subr.mxu0 0.0
        %1550 = vmatpush1.msra.mxu0 0.0
        %1551 = vmatprep.subr.mxu0 0.0
        %1552 = vmatpush1.msra.mxu0 0.0
        %1553 = vmatprep.subr.mxu0 0.0
        %1554 = vmatpush1.msra.mxu0 0.0
        %1555 = vmatprep.subr.mxu0 0.0
        %1556 = vmatpush1.msra.mxu0 0.0
        %1557 = vmatprep.subr.mxu0 0.0
        %1558 = vmatpush1.msra.mxu0 0.0
        %1559 = vmatprep.subr.mxu0 0.0
        %1560 = vmatpush1.msra.mxu0 0.0
        %1561 = vmatprep.subr.mxu0 0.0
        %1562 = vmatpush1.msra.mxu0 0.0
        %1563 = vmatprep.subr.mxu0 0.0
        %1564 = vmatpush1.msra.mxu0 0.0
        %1565 = vmatprep.subr.mxu0 0.0
        %1566 = vmatpush1.msra.mxu0 0.0
        %1567 = vmatprep.subr.mxu0 0.0
        %1568 = vmatpush1.msra.mxu0 0.0
        %1569 = vmatprep.subr.mxu0 0.0
        %1570 = vmatpush1.msra.mxu0 0.0
        %1571 = vmatprep.subr.mxu0 0.0
        %1572 = vmatpush1.msra.mxu0 0.0
        %1573 = vmatprep.subr.mxu0 0.0
        %1574 = vmatpush1.msra.mxu0 %v1538
        %1575 = vmatprep.subr.mxu0 0.0
        %1576 = vmatpush1.msra.mxu0 %v1537
        %1577 = vmatprep.subr.mxu0 0.0
        %1578 = vmatpush1.msra.mxu0 %v1536
        %1579 = vmatprep.subr.mxu0 0.0
        %1580 = vmatpush1.msra.mxu0 %v1535
        %1581 = vmatprep.subr.mxu0 0.0
        %1582 = vmatpush2.msra.mxu0 0.0
        %1583 = vmatprep.subr.mxu0 0.0
        %1584 = vmatpush2.msra.mxu0 0.0
        %1585 = vmatprep.subr.mxu0 0.0
        %1586 = vmatpush2.msra.mxu0 0.0
        %1587 = vmatprep.subr.mxu0 0.0
        %1588 = vmatpush2.msra.mxu0 0.0
        %1589 = vmatprep.subr.mxu0 0.0
        %1590 = vmatpush2.msra.mxu0 0.0
        %1591 = vmatprep.subr.mxu0 0.0
        %1592 = vmatpush2.msra.mxu0 0.0
        %1593 = vmatprep.subr.mxu0 0.0
        %1594 = vmatpush2.msra.mxu0 0.0
        %1595 = vmatprep.subr.mxu0 0.0
        %1596 = vmatpush2.msra.mxu0 0.0
        %1597 = vmatprep.subr.mxu0 0.0
        %1598 = vmatpush2.msra.mxu0 0.0
        %1599 = vmatprep.subr.mxu0 0.0
        %1600 = vmatpush2.msra.mxu0 0.0
        %1601 = vmatprep.subr.mxu0 0.0
        %1602 = vmatpush2.msra.mxu0 0.0
        %1603 = vmatprep.subr.mxu0 0.0
        %1604 = vmatpush2.msra.mxu0 0.0
        %1605 = vmatprep.subr.mxu0 0.0
        %1606 = vmatpush2.msra.mxu0 0.0
        %1607 = vmatprep.subr.mxu0 0.0
        %1608 = vmatpush2.msra.mxu0 0.0
        %1609 = vmatprep.subr.mxu0 0.0
        %1610 = vmatpush2.msra.mxu0 0.0
        %1611 = vmatprep.subr.mxu0 0.0
        %1612 = vmatpush2.msra.mxu0 0.0
        %1613 = vmatprep.mubr.f32.mxu0 0.0
        %1614 = vmatmul.mubr.f32.gmra.mxu0 %v1547
        %v1615 = vpop.f32.mrf.mxu0
        %v1616 = vadd.f32 %v1544, %v1615
        %v1617 = vpop.f32.mrf.mxu0
        %1618 = vdwg.mxu0
        %v1619 = vmax.f32 %v1616, 0.0
        %v1620 = vld [vmem:[%s6] sm:$0xff]
        %v1621 = vld [vmem:[%s6 + $0x8] sm:$0xff]
        %v1622 = vld [vmem:[%s6 + $0x10] sm:$0xff]
        %v1623 = vld [vmem:[%s6 + $0x18] sm:$0xff]
        %v1624 = vld [vmem:[%s6 + $0x20] sm:$0xff]
        %v1625 = vld [vmem:[%s6 + $0x28] sm:$0xff]
        %v1626 = vld [vmem:[%s6 + $0x30] sm:$0xff]
        %v1627 = vld [vmem:[%s6 + $0x38] sm:$0xff]
        %v1628 = vld [vmem:[%s6 + $0x40] sm:$0xff]
        %v1629 = vld [vmem:[%s6 + $0x48] sm:$0xff]
        %v1630 = vld [vmem:[%s6 + $0x50] sm:$0xff]
        %v1631 = vld [vmem:[%s6 + $0x58] sm:$0xff]
        %v1632 = vld [vmem:[%s6 + $0x60] sm:$0xff]
        %v1633 = vld [vmem:[%s6 + $0x68] sm:$0xff]
        %v1634 = vld [vmem:[%s6 + $0x70] sm:$0xff]
        %v1635 = vld [vmem:[%s6 + $0x78] sm:$0xff]
        %v1636 = vld [vmem:[%s7] sm:$0x1]
        %v1638 = vlaneseq
        %v1639 = vshrl.u32 %v1638, 7
        %v1640 = vsub.s32 0, %v1639
        %v1641 = vrot.slane %v1636, %v1640
        %1643 = vmatprep.subr.mxu0 0.0
        %1644 = vmatpush1.msra.mxu0 %v1635
        %1645 = vmatprep.subr.mxu0 0.0
        %1646 = vmatpush1.msra.mxu0 %v1634
        %1647 = vmatprep.subr.mxu0 0.0
        %1648 = vmatpush1.msra.mxu0 %v1633
        %1649 = vmatprep.subr.mxu0 0.0
        %1650 = vmatpush1.msra.mxu0 %v1632
        %1651 = vmatprep.subr.mxu0 0.0
        %1652 = vmatpush1.msra.mxu0 %v1631
        %1653 = vmatprep.subr.mxu0 0.0
        %1654 = vmatpush1.msra.mxu0 %v1630
        %1655 = vmatprep.subr.mxu0 0.0
        %1656 = vmatpush1.msra.mxu0 %v1629
        %1657 = vmatprep.subr.mxu0 0.0
        %1658 = vmatpush1.msra.mxu0 %v1628
        %1659 = vmatprep.subr.mxu0 0.0
        %1660 = vmatpush1.msra.mxu0 %v1627
        %1661 = vmatprep.subr.mxu0 0.0
        %1662 = vmatpush1.msra.mxu0 %v1626
        %1663 = vmatprep.subr.mxu0 0.0
        %1664 = vmatpush1.msra.mxu0 %v1625
        %1665 = vmatprep.subr.mxu0 0.0
        %1666 = vmatpush1.msra.mxu0 %v1624
        %1667 = vmatprep.subr.mxu0 0.0
        %1668 = vmatpush1.msra.mxu0 %v1623
        %1669 = vmatprep.subr.mxu0 0.0
        %1670 = vmatpush1.msra.mxu0 %v1622
        %1671 = vmatprep.subr.mxu0 0.0
        %1672 = vmatpush1.msra.mxu0 %v1621
        %1673 = vmatprep.subr.mxu0 0.0
        %1674 = vmatpush1.msra.mxu0 %v1620
        %1675 = vmatprep.subr.mxu0 0.0
        %1676 = vmatpush2.msra.mxu0 0.0
        %1677 = vmatprep.subr.mxu0 0.0
        %1678 = vmatpush2.msra.mxu0 0.0
        %1679 = vmatprep.subr.mxu0 0.0
        %1680 = vmatpush2.msra.mxu0 0.0
        %1681 = vmatprep.subr.mxu0 0.0
        %1682 = vmatpush2.msra.mxu0 0.0
        %1683 = vmatprep.subr.mxu0 0.0
        %1684 = vmatpush2.msra.mxu0 0.0
        %1685 = vmatprep.subr.mxu0 0.0
        %1686 = vmatpush2.msra.mxu0 0.0
        %1687 = vmatprep.subr.mxu0 0.0
        %1688 = vmatpush2.msra.mxu0 0.0
        %1689 = vmatprep.subr.mxu0 0.0
        %1690 = vmatpush2.msra.mxu0 0.0
        %1691 = vmatprep.subr.mxu0 0.0
        %1692 = vmatpush2.msra.mxu0 0.0
        %1693 = vmatprep.subr.mxu0 0.0
        %1694 = vmatpush2.msra.mxu0 0.0
        %1695 = vmatprep.subr.mxu0 0.0
        %1696 = vmatpush2.msra.mxu0 0.0
        %1697 = vmatprep.subr.mxu0 0.0
        %1698 = vmatpush2.msra.mxu0 0.0
        %1699 = vmatprep.subr.mxu0 0.0
        %1700 = vmatpush2.msra.mxu0 0.0
        %1701 = vmatprep.subr.mxu0 0.0
        %1702 = vmatpush2.msra.mxu0 0.0
        %1703 = vmatprep.subr.mxu0 0.0
        %1704 = vmatpush2.msra.mxu0 0.0
        %1705 = vmatprep.subr.mxu0 0.0
        %1706 = vmatpush2.msra.mxu0 0.0
        %1707 = vmatprep.mubr.f32.mxu0 0.0
        %1708 = vmatmul.mubr.f32.gmra.mxu0 %v1619
        %v1709 = vpop.f32.mrf.mxu0
        %v1710 = vadd.f32 %v1641, %v1709
        %v1711 = vpop.f32.mrf.mxu0
        %1712 = vdwg.mxu0
        %v1713 = vadd.f32 %v1519, %v1710
        %1714 = vst.msk [vmem:[%s296] sm:$0xff] %vm302, %v1713
        %s1715 = sand.u32 %s203, 1
        %s1716 = scalar_lea.sflag [#allocation3], %s1715
        %s1717 = sand.u32 %s203, 1
        %s1718 = smul.addr %s1717, 8
        %s1719 = scalar_lea.vmem [#allocation2], %s1718
        // Predicated region
        $region53: #{tpu_custom_call.1} parent=51 // pred_check
          %p1720 = pneg %p213
        $region54: #{tpu_custom_call.1} parent=51 // pred_check_branch
          %1722 = sbr.rel (%p1720) target = $region56
        $region55: #{tpu_custom_call.1} parent=51 // pred_region
          %s1724 = ssub.s32 128, 128
          %1725 = vsyncadd %s1716, %s1724
          %s1726 = smul.addr %s22, 128
          %s1727 = scalar_lea.hbm %s8, %s1726
          %s1729 = sshll.u32 %s1719, 4
          %s1730 = int_to_ptr.vmem [resolvable:$true] %s1729
          %1732 = dma.vmem_to_hbm [thread:$0]  %s1730, 128, %s1727, %s1716
        $region56: #{tpu_custom_call.1} parent=51 // pred_fallthru
          _
      $region52: #{tpu_custom_call.1} parent=5 // pred_fallthru
        _
      %p1733 = scmp.le.s32.totalorder 2, %s17
      // Predicated region
      $region57: #{tpu_custom_call.1} parent=5 // pred_check
        %p1734 = pneg %p1733
      $region58: #{tpu_custom_call.1} parent=5 // pred_check_branch
        %1736 = sbr.rel (%p1734) target = $region60
      $region59: #{tpu_custom_call.1} parent=5 // pred_region
        %s1737 = ssub.s32 %s17, 2
        // Predicated region
        $region61: #{tpu_custom_call.1} parent=59 // pred_check
          %p1738 = pneg %p219
        $region62: #{tpu_custom_call.1} parent=59 // pred_check_branch
          %1740 = sbr.rel (%p1738) target = $region64
        $region63: #{tpu_custom_call.1} parent=59 // pred_region
          %s1741 = sand.u32 %s204, 1
          %s1742 = scalar_lea.sflag [#allocation3], %s1741
          %s1743 = sand.u32 %s204, 1
          %s1744 = smul.addr %s1743, 8
          %s1745 = scalar_lea.vmem [#allocation2], %s1744
          %1746 = dma.done %s1742, 128
        $region64: #{tpu_custom_call.1} parent=59 // pred_fallthru
          _
      $region60: #{tpu_custom_call.1} parent=5 // pred_fallthru
        _
    $region6: #{tpu_custom_call.1} parent=1 // loop_footer
      %s21 = sadd.s32 1, %s17
    $region7: #{tpu_custom_call.1} parent=1 // loop_footer_branch
      %16 = sbr.rel target = $region3
    $region8: #{tpu_custom_call.1} parent=1 // loop_exit
      _
    %1747 = vsyncpa [#allocation3], 1
    %s1748 = scalar_lea.sflag [#allocation3], 1
    %1749 = vsyncpa %s1748, 1

</llo_original>
